<compile_context>
chip_gen: v6e
topology: v6e:2x2x1
jax: 0.10.0
libtpu: 0.0.40
codegen_flags: <defaults>
</compile_context>

<pallas_src>
import functools
import math

import jax
import jax.numpy as jnp
from jax.experimental import pallas as pl
from jax.experimental.pallas import tpu as pltpu

COMPUTE_DTYPE = jnp.bfloat16           # MXU-native operand dtype (f32 accumulate)
VMEM_LIMIT = 48 * 1024 * 1024          # explicit scoped-VMEM limit (< v7x 64 MiB)


# ----------------------------------------------------------------------------
# tiling helpers
# ----------------------------------------------------------------------------
def _pick_tile(dim, cap, aligns):
    """Return (tile, padded_dim).

    If dim <= cap, the whole dim is one (full) block — exempt from the (8,128)
    rule. Otherwise search for the largest aligned divisor <= cap (preferring
    the first entry of `aligns`, e.g. 256 for MXU dims). If none exists, pad
    the dim up to a multiple of the largest aligned tile instead of silently
    making the whole dimension a single VMEM-blowing block.
    """
    if dim <= cap:
        return dim, dim
    for align in aligns:
        t = (cap // align) * align
        while t >= align:
            if dim % t == 0:
                return t, dim
            t -= align
    align = aligns[0]
    t = (cap // align) * align
    padded = ((dim + t - 1) // t) * t
    return t, padded


def _pad2(x, rows, cols):
    r, c = x.shape
    if r == rows and c == cols:
        return x
    return jnp.pad(x, ((0, rows - r), (0, cols - c)))


# ----------------------------------------------------------------------------
# Tiled linear: y = act(x @ w + b [+ epilogue_add])
# ----------------------------------------------------------------------------
def _linear_kernel(*refs, activation, has_add):
    if has_add:
        x_ref, w_ref, b_ref, add_ref, o_ref, acc_ref = refs
    else:
        x_ref, w_ref, b_ref, o_ref, acc_ref = refs
        add_ref = None

    @pl.when(pl.program_id(2) == 0)
    def _():
        acc_ref[...] = jnp.zeros_like(acc_ref)

    acc_ref[...] += jnp.dot(x_ref[...].astype(COMPUTE_DTYPE),
                            w_ref[...].astype(COMPUTE_DTYPE),
                            preferred_element_type=jnp.float32)

    @pl.when(pl.program_id(2) == pl.num_programs(2) - 1)
    def _():
        y = acc_ref[...] + b_ref[...]
        if add_ref is not None:
            y = y + add_ref[...].astype(jnp.float32)
        if activation == "relu":
            y = jnp.maximum(y, 0.0)
        o_ref[...] = y.astype(o_ref.dtype)


def linear(x, w, b, activation=None, epilogue_add=None,
           tm_cap=512, tn_cap=512, tk_cap=512):
    """y = act(x @ w + b + add); x:(M,K) w:(K,N) b:(N,) -> (M,N). Tiled/pipelined."""
    M, K = x.shape
    K2, N = w.shape
    assert K == K2
    tm, Mp = _pick_tile(M, tm_cap, (8,))
    tn, Np = _pick_tile(N, tn_cap, (256, 128))   # MXU-friendly (256 on v6e/v7x)
    tk, Kp = _pick_tile(K, tk_cap, (256, 128))

    xp = _pad2(x, Mp, Kp)
    wp = _pad2(w, Kp, Np)
    bp = (jnp.pad(b, (0, Np - N)) if Np != N else b).reshape(1, Np)

    has_add = epilogue_add is not None
    in_arrays = [xp, wp, bp]
    in_specs = [
        pl.BlockSpec((tm, tk), lambda i, j, k: (i, k)),
        pl.BlockSpec((tk, tn), lambda i, j, k: (k, j)),
        pl.BlockSpec((1, tn), lambda i, j, k: (0, j)),
    ]
    if has_add:
        in_arrays.append(_pad2(epilogue_add, Mp, Np))
        in_specs.append(pl.BlockSpec((tm, tn), lambda i, j, k: (i, j)))

    grid = (Mp // tm, Np // tn, Kp // tk)
    cost = pl.CostEstimate(flops=2 * Mp * Kp * Np, transcendentals=0,
                           bytes_accessed=4 * (Mp * Kp + Kp * Np + Mp * Np))
    out = pl.pallas_call(
        functools.partial(_linear_kernel, activation=activation, has_add=has_add),
        out_shape=jax.ShapeDtypeStruct((Mp, Np), x.dtype),
        grid_spec=pltpu.PrefetchScalarGridSpec(
            num_scalar_prefetch=0,
            grid=grid,
            in_specs=in_specs,
            out_specs=pl.BlockSpec((tm, tn), lambda i, j, k: (i, j)),
            scratch_shapes=[pltpu.VMEM((tm, tn), jnp.float32)],
        ),
        compiler_params=pltpu.CompilerParams(
            dimension_semantics=("parallel", "parallel", "arbitrary"),
            vmem_limit_bytes=VMEM_LIMIT),
        cost_estimate=cost,
    )(*in_arrays)
    if (Mp, Np) != (M, N):
        out = out[:M, :N]
    return out


# ----------------------------------------------------------------------------
# Multi-head attention: one grid step per batch element, all heads in-kernel
# (static head loop, direct per-head column stores, no concat, no HBM
# transposes; contraction on last dims avoids .T relayouts).
# ----------------------------------------------------------------------------
def _attn_kernel(qkv_ref, o_ref, *, heads, key_dim, value_dim, scale):
    hdk = heads * key_dim
    qkv = qkv_ref[0]                               # (S, H*(2dk+dv)), one VMEM read
    dn = (((1,), (1,)), ((), ()))                  # contract last dims (no .T)
    for h in range(heads):                         # static unroll over heads
        q = (qkv[:, h * key_dim:(h + 1) * key_dim] * scale).astype(COMPUTE_DTYPE)
        k = qkv[:, hdk + h * key_dim: hdk + (h + 1) * key_dim].astype(COMPUTE_DTYPE)
        v = qkv[:, 2 * hdk + h * value_dim:
                2 * hdk + (h + 1) * value_dim].astype(COMPUTE_DTYPE)
        s = jax.lax.dot_general(q, k, dn, preferred_element_type=jnp.float32)
        m = jnp.max(s, axis=-1, keepdims=True)
        p = jnp.exp(s - m)
        denom = jnp.sum(p, axis=-1, keepdims=True)
        p = p * pl.reciprocal(denom, approx=True)  # EUP slot, ~free
        out_h = jnp.dot(p.astype(COMPUTE_DTYPE), v,
                        preferred_element_type=jnp.float32)
        # direct per-head store: frees registers immediately, no concat copy
        o_ref[0, :, h * value_dim:(h + 1) * value_dim] = out_h.astype(o_ref.dtype)


def attention(qkv, heads, key_dim, value_dim):
    """qkv: (B, S, H*(2*dk+dv)) -> (B, S, H*dv)."""
    B, S, Htot = qkv.shape
    hdv = heads * value_dim
    scale = 1.0 / math.sqrt(key_dim)
    return pl.pallas_call(
        functools.partial(_attn_kernel, heads=heads, key_dim=key_dim,
                          value_dim=value_dim, scale=scale),
        out_shape=jax.ShapeDtypeStruct((B, S, hdv), qkv.dtype),
        grid=(B,),
        in_specs=[pl.BlockSpec((1, S, Htot), lambda b: (b, 0, 0))],
        out_specs=pl.BlockSpec((1, S, hdv), lambda b: (b, 0, 0)),
        compiler_params=pltpu.CompilerParams(
            dimension_semantics=("parallel",), vmem_limit_bytes=VMEM_LIMIT),
    )(qkv)


# ----------------------------------------------------------------------------
# Fused: LayerNorm(x + attn @ wo + bo)   (output projection + residual + LN)
# ----------------------------------------------------------------------------
def _oproj_addln_kernel(x_ref, a_ref, wo_ref, bo_ref, g_ref, b_ref, o_ref, *, eps):
    y = jnp.dot(a_ref[...].astype(COMPUTE_DTYPE),
                wo_ref[...].astype(COMPUTE_DTYPE),
                preferred_element_type=jnp.float32) + bo_ref[...]
    h = x_ref[...].astype(jnp.float32) + y
    mean = jnp.mean(h, axis=-1, keepdims=True)
    c = h - mean
    var = jnp.mean(c * c, axis=-1, keepdims=True)
    n = c * jax.lax.rsqrt(var + eps)
    o_ref[...] = (n * g_ref[...] + b_ref[...]).astype(o_ref.dtype)


def oproj_add_layernorm(x, a, wo, bo, gamma, beta, eps=1e-5, tm_cap=512):
    M, D = x.shape
    Da = a.shape[1]
    tm, Mp = _pick_tile(M, tm_cap, (8,))
    xp = _pad2(x, Mp, D)
    ap = _pad2(a, Mp, Da)
    out = pl.pallas_call(
        functools.partial(_oproj_addln_kernel, eps=eps),
        out_shape=jax.ShapeDtypeStruct((Mp, D), x.dtype),
        grid=(Mp // tm,),
        in_specs=[
            pl.BlockSpec((tm, D), lambda i: (i, 0)),
            pl.BlockSpec((tm, Da), lambda i: (i, 0)),
            pl.BlockSpec((Da, D), lambda i: (0, 0)),
            pl.BlockSpec((1, D), lambda i: (0, 0)),
            pl.BlockSpec((1, D), lambda i: (0, 0)),
            pl.BlockSpec((1, D), lambda i: (0, 0)),
        ],
        out_specs=pl.BlockSpec((tm, D), lambda i: (i, 0)),
        compiler_params=pltpu.CompilerParams(
            dimension_semantics=("parallel",), vmem_limit_bytes=VMEM_LIMIT),
    )(xp, ap, wo, bo.reshape(1, D), gamma.reshape(1, D), beta.reshape(1, D))
    return out[:M] if Mp != M else out


# ----------------------------------------------------------------------------
# Fused: LayerNorm(x + relu(x @ w1 + b1) @ w2 + b2), tiled over ff_dim (F).
# Neither full weight nor the (tm, F) intermediate ever has to be resident at
# full F; the second matmul accumulates into a (tm, D) f32 VMEM scratch.
# ----------------------------------------------------------------------------
def _ffn_addln_kernel(x_ref, w1_ref, b1_ref, w2_ref, b2_ref, g_ref, b_ref,
                      o_ref, acc_ref, *, eps):
    f = pl.program_id(1)

    @pl.when(f == 0)
    def _():
        acc_ref[...] = jnp.zeros_like(acc_ref)

    x = x_ref[...]
    h1 = jnp.dot(x.astype(COMPUTE_DTYPE), w1_ref[...].astype(COMPUTE_DTYPE),
                 preferred_element_type=jnp.float32) + b1_ref[...]
    h1 = jnp.maximum(h1, 0.0)                        # (tm, tf) stays in VMEM
    acc_ref[...] += jnp.dot(h1.astype(COMPUTE_DTYPE),
                            w2_ref[...].astype(COMPUTE_DTYPE),
                            preferred_element_type=jnp.float32)

    @pl.when(f == pl.num_programs(1) - 1)
    def _():
        h = x.astype(jnp.float32) + acc_ref[...] + b2_ref[...]
        mean = jnp.mean(h, axis=-1, keepdims=True)
        c = h - mean
        var = jnp.mean(c * c, axis=-1, keepdims=True)
        n = c * jax.lax.rsqrt(var + eps)
        o_ref[...] = (n * g_ref[...] + b_ref[...]).astype(o_ref.dtype)


def ffn_add_layernorm(x, w1, b1, w2, b2, gamma, beta, eps=1e-5,
                      tm_cap=512, tf_cap=512):
    M, D = x.shape
    F = w1.shape[1]
    tm, Mp = _pick_tile(M, tm_cap, (8,))
    tf, Fp = _pick_tile(F, tf_cap, (256, 128))
    xp = _pad2(x, Mp, D)
    w1p = _pad2(w1, D, Fp)
    b1p = (jnp.pad(b1, (0, Fp - F)) if Fp != F else b1).reshape(1, Fp)
    w2p = _pad2(w2, Fp, D)
    grid = (Mp // tm, Fp // tf)
    out = pl.pallas_call(
        functools.partial(_ffn_addln_kernel, eps=eps),
        out_shape=jax.ShapeDtypeStruct((Mp, D), x.dtype),
        grid_spec=pltpu.PrefetchScalarGridSpec(
            num_scalar_prefetch=0,
            grid=grid,
            in_specs=[
                pl.BlockSpec((tm, D), lambda i, f: (i, 0)),
                pl.BlockSpec((D, tf), lambda i, f: (0, f)),
                pl.BlockSpec((1, tf), lambda i, f: (0, f)),
                pl.BlockSpec((tf, D), lambda i, f: (f, 0)),
                pl.BlockSpec((1, D), lambda i, f: (0, 0)),
                pl.BlockSpec((1, D), lambda i, f: (0, 0)),
                pl.BlockSpec((1, D), lambda i, f: (0, 0)),
            ],
            out_specs=pl.BlockSpec((tm, D), lambda i, f: (i, 0)),
            scratch_shapes=[pltpu.VMEM((tm, D), jnp.float32)],
        ),
        compiler_params=pltpu.CompilerParams(
            dimension_semantics=("parallel", "arbitrary"),
            vmem_limit_bytes=VMEM_LIMIT),
    )(xp, w1p, b1p, w2p, b2.reshape(1, D),
      gamma.reshape(1, D), beta.reshape(1, D))
    return out[:M] if Mp != M else out


# ----------------------------------------------------------------------------
# Parameter init (deterministic; xavier-uniform matrices, zero biases)
# ----------------------------------------------------------------------------
def _xavier(key, fan_in, fan_out):
    limit = math.sqrt(6.0 / (fan_in + fan_out))
    return jax.random.uniform(key, (fan_in, fan_out), jnp.float32, -limit, limit)


def positional_encoding(max_len, d_model):
    pos = jnp.arange(max_len, dtype=jnp.float32)[:, None]
    i = jnp.arange(0, d_model, 2, dtype=jnp.float32)[None, :]
    angle = pos / jnp.power(10000.0, i / d_model)
    pe = jnp.zeros((max_len, d_model), jnp.float32)
    pe = pe.at[:, 0::2].set(jnp.sin(angle))
    pe = pe.at[:, 1::2].set(jnp.cos(angle))
    return pe


def init_params(key, in_dim, out_dim, N, heads, model_dim, key_dim, value_dim,
                ff_dim, max_len=10000):
    keys = iter(jax.random.split(key, 8 * N + 4))
    params = {
        "embed_w": _xavier(next(keys), in_dim, model_dim),
        "embed_b": jnp.zeros((model_dim,), jnp.float32),
        "pe": positional_encoding(max_len, model_dim),
        "fc_w": _xavier(next(keys), model_dim, out_dim),
        "fc_b": jnp.zeros((out_dim,), jnp.float32),
        "layers": [],
    }
    hdk, hdv = heads * key_dim, heads * value_dim
    for _ in range(N):
        wq = _xavier(next(keys), model_dim, hdk)
        wk = _xavier(next(keys), model_dim, hdk)
        wv = _xavier(next(keys), model_dim, hdv)
        layer = {
            # fused Q|K|V projection -> one MXU matmul per layer
            "wqkv": jnp.concatenate([wq, wk, wv], axis=1),
            "bqkv": jnp.zeros((2 * hdk + hdv,), jnp.float32),
            "wo": _xavier(next(keys), hdv, model_dim),
            "bo": jnp.zeros((model_dim,), jnp.float32),
            "ln1_g": jnp.ones((model_dim,), jnp.float32),
            "ln1_b": jnp.zeros((model_dim,), jnp.float32),
            "w1": _xavier(next(keys), model_dim, ff_dim),
            "b1": jnp.zeros((ff_dim,), jnp.float32),
            "w2": _xavier(next(keys), ff_dim, model_dim),
            "b2": jnp.zeros((model_dim,), jnp.float32),
            "ln2_g": jnp.ones((model_dim,), jnp.float32),
            "ln2_b": jnp.zeros((model_dim,), jnp.float32),
        }
        params["layers"].append(layer)
    return params


# ----------------------------------------------------------------------------
# Forward pass (glue in JAX, compute in Pallas kernels)
# ----------------------------------------------------------------------------
def encoder_layer(x2, p, B, S, heads, key_dim, value_dim):
    # x2: (B*S, D)
    qkv = linear(x2, p["wqkv"], p["bqkv"])                   # (B*S, H*(2dk+dv))
    qkv = qkv.reshape(B, S, -1)                              # contiguous reshape
    attn = attention(qkv, heads, key_dim, value_dim)         # (B, S, H*dv)
    attn = attn.reshape(B * S, heads * value_dim)
    # post-norm sublayer 1: LN(x + attn @ wo + bo)  -- fused kernel
    h = oproj_add_layernorm(x2, attn, p["wo"], p["bo"], p["ln1_g"], p["ln1_b"])
    # post-norm sublayer 2: LN(h + FFN(h))          -- fused, F-tiled kernel
    out = ffn_add_layernorm(h, p["w1"], p["b1"], p["w2"], p["b2"],
                            p["ln2_g"], p["ln2_b"])
    return out


def transformer_forward(params, x, heads, key_dim, value_dim):
    # batch_first=True -> no transpose needed
    B, S, in_dim = x.shape
    D = params["embed_w"].shape[1]
    # positional encoding folded into the embedding matmul epilogue
    pe_rows = jnp.broadcast_to(params["pe"][:S][None, :, :], (B, S, D))
    pe_rows = pe_rows.reshape(B * S, D)
    h2 = linear(x.reshape(B * S, in_dim), params["embed_w"], params["embed_b"],
                epilogue_add=pe_rows)
    for layer in params["layers"]:
        h2 = encoder_layer(h2, layer, B, S, heads, key_dim, value_dim)
    out_dim = params["fc_w"].shape[1]
    out = linear(h2, params["fc_w"], params["fc_b"])
    return out.reshape(B, S, out_dim)


# ----------------------------------------------------------------------------
if __name__ == "__main__":
    # Small, module-consistent shapes
    B, S = 2, 8
    in_dim, out_dim = 16, 16
    N, heads = 2, 2
    model_dim, key_dim, value_dim, ff_dim = 32, 16, 16, 64
    max_len = 64  # plenty for S=8 (module default 10000; kept small here)

    root = jax.random.PRNGKey(0)
    k_param, k_x = jax.random.split(root)
    params = init_params(k_param, in_dim, out_dim, N, heads, model_dim,
                         key_dim, value_dim, ff_dim, max_len=max_len)
    x = jax.random.normal(k_x, (B, S, in_dim), dtype=jnp.float32)

    fwd = jax.jit(functools.partial(transformer_forward, heads=heads,
                                    key_dim=key_dim, value_dim=value_dim))
    y = fwd(params, x)
    jax.block_until_ready(y)
    assert y.shape == (B, S, out_dim)
    assert bool(jnp.all(jnp.isfinite(y)))
    print("KERNEL_OK")
</pallas_src>

<mosaic_0001>
module attributes {stable_mosaic.version = 11 : i64} {
  func.func @_linear_kernel(%arg0: i32, %arg1: i32, %arg2: i32, %arg3: memref<16x16xf32, #tpu.memory_space<vmem>>, %arg4: memref<16x32xf32, #tpu.memory_space<vmem>>, %arg5: memref<1x32xf32, #tpu.memory_space<vmem>>, %arg6: memref<16x32xf32, #tpu.memory_space<vmem>>, %arg7: memref<16x32xf32, #tpu.memory_space<vmem>>, %arg8: memref<16x32xf32, #tpu.memory_space<vmem>>) attributes {dimension_semantics = [#tpu.dimension_semantics<parallel>, #tpu.dimension_semantics<parallel>, #tpu.dimension_semantics<arbitrary>], iteration_bounds = array<i64: 1, 1, 1>, scalar_prefetch = 0 : i64, scratch_operands = 1 : i64, tpu.core_type = #tpu.core_type<tc>, window_params = [{transform_indices = @transform_0, window_bounds = array<i64: 16, 16>}, {transform_indices = @transform_1, window_bounds = array<i64: 16, 32>}, {transform_indices = @transform_2, window_bounds = array<i64: 1, 32>}, {transform_indices = @transform_3, window_bounds = array<i64: 16, 32>}, {transform_indices = @transform_4, window_bounds = array<i64: 16, 32>}]} {
    %c0_i32 = arith.constant 0 : i32
    %0 = arith.cmpi eq, %arg2, %c0_i32 : i32
    %1 = arith.extui %0 : i1 to i32
    %c0_i32_0 = arith.constant 0 : i32
    %2 = arith.cmpi ne, %1, %c0_i32_0 : i32
    scf.if %2 {
      %cst_10 = arith.constant 0.000000e+00 : f32
      %14 = vector.broadcast %cst_10 : f32 to vector<16x32xf32>
      %c0_11 = arith.constant 0 : index
      %c0_12 = arith.constant 0 : index
      %15 = vector.load %arg8[%c0_11, %c0_12] : memref<16x32xf32, #tpu.memory_space<vmem>>, vector<16x32xf32>
      tpu.vector_store %arg8[%c0_11, %c0_12], %14 {strides = array<i32>} : memref<16x32xf32, #tpu.memory_space<vmem>>, vector<16x32xf32>,
    } else {
    }
    %c0 = arith.constant 0 : index
    %c0_1 = arith.constant 0 : index
    %3 = vector.load %arg8[%c0, %c0_1] : memref<16x32xf32, #tpu.memory_space<vmem>>, vector<16x32xf32>
    %c0_2 = arith.constant 0 : index
    %c0_3 = arith.constant 0 : index
    %4 = vector.load %arg3[%c0_2, %c0_3] : memref<16x16xf32, #tpu.memory_space<vmem>>, vector<16x16xf32>
    %5 = arith.truncf %4 : vector<16x16xf32> to vector<16x16xbf16>
    %c0_4 = arith.constant 0 : index
    %c0_5 = arith.constant 0 : index
    %6 = vector.load %arg4[%c0_4, %c0_5] : memref<16x32xf32, #tpu.memory_space<vmem>>, vector<16x32xf32>
    %7 = arith.truncf %6 : vector<16x32xf32> to vector<16x32xbf16>
    %cst = arith.constant dense<0.000000e+00> : vector<16x32xf32>
    %8 = tpu.matmul %5, %7, %cst {dimension_numbers = #tpu.dot_dimension_numbers<[1], [0], [0], [1], [0, 0, 1, 1], [], []>} : vector<16x16xbf16>, vector<16x32xbf16>, vector<16x32xf32> -> vector<16x32xf32>
    %9 = arith.addf %3, %8 : vector<16x32xf32>
    %c0_6 = arith.constant 0 : index
    %c0_7 = arith.constant 0 : index
    %10 = vector.load %arg8[%c0_6, %c0_7] : memref<16x32xf32, #tpu.memory_space<vmem>>, vector<16x32xf32>
    tpu.vector_store %arg8[%c0_6, %c0_7], %9 {strides = array<i32>} : memref<16x32xf32, #tpu.memory_space<vmem>>, vector<16x32xf32>,
    %c0_i32_8 = arith.constant 0 : i32
    %11 = arith.cmpi eq, %arg2, %c0_i32_8 : i32
    %12 = arith.extui %11 : i1 to i32
    %c0_i32_9 = arith.constant 0 : i32
    %13 = arith.cmpi ne, %12, %c0_i32_9 : i32
    scf.if %13 {
      %c0_10 = arith.constant 0 : index
      %c0_11 = arith.constant 0 : index
      %14 = vector.load %arg8[%c0_10, %c0_11] : memref<16x32xf32, #tpu.memory_space<vmem>>, vector<16x32xf32>
      %c0_12 = arith.constant 0 : index
      %c0_13 = arith.constant 0 : index
      %15 = vector.load %arg5[%c0_12, %c0_13] : memref<1x32xf32, #tpu.memory_space<vmem>>, vector<1x32xf32>
      %16 = vector.broadcast %15 : vector<1x32xf32> to vector<16x32xf32>
      %17 = arith.addf %14, %16 : vector<16x32xf32>
      %c0_14 = arith.constant 0 : index
      %c0_15 = arith.constant 0 : index
      %18 = vector.load %arg6[%c0_14, %c0_15] : memref<16x32xf32, #tpu.memory_space<vmem>>, vector<16x32xf32>
      %19 = arith.addf %17, %18 : vector<16x32xf32>
      %c0_16 = arith.constant 0 : index
      %c0_17 = arith.constant 0 : index
      %20 = vector.load %arg7[%c0_16, %c0_17] : memref<16x32xf32, #tpu.memory_space<vmem>>, vector<16x32xf32>
      tpu.vector_store %arg7[%c0_16, %c0_17], %19 {strides = array<i32>} : memref<16x32xf32, #tpu.memory_space<vmem>>, vector<16x32xf32>,
    } else {
    }
    return
  }
  func.func @transform_0(%arg0: i32, %arg1: i32, %arg2: i32) -> (i32, i32) {
    %c0_i32 = arith.constant 0 : i32
    return %arg0, %arg2 : i32, i32
  }
  func.func @transform_1(%arg0: i32, %arg1: i32, %arg2: i32) -> (i32, i32) {
    %c0_i32 = arith.constant 0 : i32
    return %arg2, %arg1 : i32, i32
  }
  func.func @transform_2(%arg0: i32, %arg1: i32, %arg2: i32) -> (i32, i32) {
    %c0_i32 = arith.constant 0 : i32
    %c0_i32_0 = arith.constant 0 : i32
    return %c0_i32, %arg1 : i32, i32
  }
  func.func @transform_3(%arg0: i32, %arg1: i32, %arg2: i32) -> (i32, i32) {
    %c0_i32 = arith.constant 0 : i32
    return %arg0, %arg1 : i32, i32
  }
  func.func @transform_4(%arg0: i32, %arg1: i32, %arg2: i32) -> (i32, i32) {
    %c0_i32 = arith.constant 0 : i32
    return %arg0, %arg1 : i32, i32
  }
}

module attributes {stable_mosaic.version = 11 : i64} {
  func.func @_linear_kernel(%arg0: i32, %arg1: i32, %arg2: i32, %arg3: memref<16x32xf32, #tpu.memory_space<vmem>>, %arg4: memref<32x96xf32, #tpu.memory_space<vmem>>, %arg5: memref<1x96xf32, #tpu.memory_space<vmem>>, %arg6: memref<16x96xf32, #tpu.memory_space<vmem>>, %arg7: memref<16x96xf32, #tpu.memory_space<vmem>>) attributes {dimension_semantics = [#tpu.dimension_semantics<parallel>, #tpu.dimension_semantics<parallel>, #tpu.dimension_semantics<arbitrary>], iteration_bounds = array<i64: 1, 1, 1>, scalar_prefetch = 0 : i64, scratch_operands = 1 : i64, tpu.core_type = #tpu.core_type<tc>, window_params = [{transform_indices = @transform_0, window_bounds = array<i64: 16, 32>}, {transform_indices = @transform_1, window_bounds = array<i64: 32, 96>}, {transform_indices = @transform_2, window_bounds = array<i64: 1, 96>}, {transform_indices = @transform_3, window_bounds = array<i64: 16, 96>}]} {
    %c0_i32 = arith.constant 0 : i32
    %0 = arith.cmpi eq, %arg2, %c0_i32 : i32
    %1 = arith.extui %0 : i1 to i32
    %c0_i32_0 = arith.constant 0 : i32
    %2 = arith.cmpi ne, %1, %c0_i32_0 : i32
    scf.if %2 {
      %cst_10 = arith.constant 0.000000e+00 : f32
      %14 = vector.broadcast %cst_10 : f32 to vector<16x96xf32>
      %c0_11 = arith.constant 0 : index
      %c0_12 = arith.constant 0 : index
      %15 = vector.load %arg7[%c0_11, %c0_12] : memref<16x96xf32, #tpu.memory_space<vmem>>, vector<16x96xf32>
      tpu.vector_store %arg7[%c0_11, %c0_12], %14 {strides = array<i32>} : memref<16x96xf32, #tpu.memory_space<vmem>>, vector<16x96xf32>,
    } else {
    }
    %c0 = arith.constant 0 : index
    %c0_1 = arith.constant 0 : index
    %3 = vector.load %arg7[%c0, %c0_1] : memref<16x96xf32, #tpu.memory_space<vmem>>, vector<16x96xf32>
    %c0_2 = arith.constant 0 : index
    %c0_3 = arith.constant 0 : index
    %4 = vector.load %arg3[%c0_2, %c0_3] : memref<16x32xf32, #tpu.memory_space<vmem>>, vector<16x32xf32>
    %5 = arith.truncf %4 : vector<16x32xf32> to vector<16x32xbf16>
    %c0_4 = arith.constant 0 : index
    %c0_5 = arith.constant 0 : index
    %6 = vector.load %arg4[%c0_4, %c0_5] : memref<32x96xf32, #tpu.memory_space<vmem>>, vector<32x96xf32>
    %7 = arith.truncf %6 : vector<32x96xf32> to vector<32x96xbf16>
    %cst = arith.constant dense<0.000000e+00> : vector<16x96xf32>
    %8 = tpu.matmul %5, %7, %cst {dimension_numbers = #tpu.dot_dimension_numbers<[1], [0], [0], [1], [0, 0, 1, 1], [], []>} : vector<16x32xbf16>, vector<32x96xbf16>, vector<16x96xf32> -> vector<16x96xf32>
    %9 = arith.addf %3, %8 : vector<16x96xf32>
    %c0_6 = arith.constant 0 : index
    %c0_7 = arith.constant 0 : index
    %10 = vector.load %arg7[%c0_6, %c0_7] : memref<16x96xf32, #tpu.memory_space<vmem>>, vector<16x96xf32>
    tpu.vector_store %arg7[%c0_6, %c0_7], %9 {strides = array<i32>} : memref<16x96xf32, #tpu.memory_space<vmem>>, vector<16x96xf32>,
    %c0_i32_8 = arith.constant 0 : i32
    %11 = arith.cmpi eq, %arg2, %c0_i32_8 : i32
    %12 = arith.extui %11 : i1 to i32
    %c0_i32_9 = arith.constant 0 : i32
    %13 = arith.cmpi ne, %12, %c0_i32_9 : i32
    scf.if %13 {
      %c0_10 = arith.constant 0 : index
      %c0_11 = arith.constant 0 : index
      %14 = vector.load %arg7[%c0_10, %c0_11] : memref<16x96xf32, #tpu.memory_space<vmem>>, vector<16x96xf32>
      %c0_12 = arith.constant 0 : index
      %c0_13 = arith.constant 0 : index
      %15 = vector.load %arg5[%c0_12, %c0_13] : memref<1x96xf32, #tpu.memory_space<vmem>>, vector<1x96xf32>
      %16 = vector.broadcast %15 : vector<1x96xf32> to vector<16x96xf32>
      %17 = arith.addf %14, %16 : vector<16x96xf32>
      %c0_14 = arith.constant 0 : index
      %c0_15 = arith.constant 0 : index
      %18 = vector.load %arg6[%c0_14, %c0_15] : memref<16x96xf32, #tpu.memory_space<vmem>>, vector<16x96xf32>
      tpu.vector_store %arg6[%c0_14, %c0_15], %17 {strides = array<i32>} : memref<16x96xf32, #tpu.memory_space<vmem>>, vector<16x96xf32>,
    } else {
    }
    return
  }
  func.func @transform_0(%arg0: i32, %arg1: i32, %arg2: i32) -> (i32, i32) {
    %c0_i32 = arith.constant 0 : i32
    return %arg0, %arg2 : i32, i32
  }
  func.func @transform_1(%arg0: i32, %arg1: i32, %arg2: i32) -> (i32, i32) {
    %c0_i32 = arith.constant 0 : i32
    return %arg2, %arg1 : i32, i32
  }
  func.func @transform_2(%arg0: i32, %arg1: i32, %arg2: i32) -> (i32, i32) {
    %c0_i32 = arith.constant 0 : i32
    %c0_i32_0 = arith.constant 0 : i32
    return %c0_i32, %arg1 : i32, i32
  }
  func.func @transform_3(%arg0: i32, %arg1: i32, %arg2: i32) -> (i32, i32) {
    %c0_i32 = arith.constant 0 : i32
    return %arg0, %arg1 : i32, i32
  }
}

module attributes {stable_mosaic.version = 11 : i64} {
  func.func @_attn_kernel(%arg0: i32, %arg1: memref<1x8x96xf32, #tpu.memory_space<vmem>>, %arg2: memref<1x8x32xf32, #tpu.memory_space<vmem>>) attributes {dimension_semantics = [#tpu.dimension_semantics<parallel>], iteration_bounds = array<i64: 2>, scalar_prefetch = 0 : i64, scratch_operands = 0 : i64, tpu.core_type = #tpu.core_type<tc>, window_params = [{transform_indices = @transform_0, window_bounds = array<i64: 1, 8, 96>}, {transform_indices = @transform_1, window_bounds = array<i64: 1, 8, 32>}]} {
    %c0 = arith.constant 0 : index
    %c0_0 = arith.constant 0 : index
    %c0_1 = arith.constant 0 : index
    %0 = vector.load %arg1[%c0, %c0_0, %c0_1] : memref<1x8x96xf32, #tpu.memory_space<vmem>>, vector<1x8x96xf32>
    %1 = vector.shape_cast %0 : vector<1x8x96xf32> to vector<8x96xf32>
    %2 = vector.extract_strided_slice %1 {offsets = [0, 0], sizes = [8, 16], strides = [1, 1]} : vector<8x96xf32> to vector<8x16xf32>
    %cst = arith.constant 2.500000e-01 : f32
    %3 = vector.broadcast %cst : f32 to vector<8x16xf32>
    %4 = arith.mulf %2, %3 : vector<8x16xf32>
    %5 = arith.truncf %4 : vector<8x16xf32> to vector<8x16xbf16>
    %6 = vector.extract_strided_slice %1 {offsets = [0, 32], sizes = [8, 16], strides = [1, 1]} : vector<8x96xf32> to vector<8x16xf32>
    %7 = arith.truncf %6 : vector<8x16xf32> to vector<8x16xbf16>
    %8 = vector.extract_strided_slice %1 {offsets = [0, 64], sizes = [8, 16], strides = [1, 1]} : vector<8x96xf32> to vector<8x16xf32>
    %9 = arith.truncf %8 : vector<8x16xf32> to vector<8x16xbf16>
    %cst_2 = arith.constant dense<0.000000e+00> : vector<8x8xf32>
    %10 = tpu.matmul %5, %7, %cst_2 {dimension_numbers = #tpu.dot_dimension_numbers<[1], [1], [0], [0], [0, 0, 1, 0], [], []>} : vector<8x16xbf16>, vector<8x16xbf16>, vector<8x8xf32> -> vector<8x8xf32>
    %cst_3 = arith.constant dense<0xFF800000> : vector<8xf32>
    %11 = vector.multi_reduction <maximumf>, %10, %cst_3 [1] : vector<8x8xf32> to vector<8xf32>
    %12 = vector.shape_cast %11 : vector<8xf32> to vector<8x1xf32>
    %13 = vector.broadcast %12 : vector<8x1xf32> to vector<8x8xf32>
    %14 = arith.subf %10, %13 : vector<8x8xf32>
    %15 = math.exp %14 : vector<8x8xf32>
    %cst_4 = arith.constant dense<0.000000e+00> : vector<8xf32>
    %16 = vector.multi_reduction <add>, %15, %cst_4 [1] : vector<8x8xf32> to vector<8xf32>
    %17 = vector.shape_cast %16 : vector<8xf32> to vector<8x1xf32>
    %18 = tpu.reciprocal %17 {approx = true} : vector<8x1xf32> -> vector<8x1xf32>
    %19 = vector.broadcast %18 : vector<8x1xf32> to vector<8x8xf32>
    %20 = arith.mulf %15, %19 : vector<8x8xf32>
    %21 = arith.truncf %20 : vector<8x8xf32> to vector<8x8xbf16>
    %cst_5 = arith.constant dense<0.000000e+00> : vector<8x16xf32>
    %22 = tpu.matmul %21, %9, %cst_5 {dimension_numbers = #tpu.dot_dimension_numbers<[1], [0], [0], [1], [0, 0, 1, 1], [], []>} : vector<8x8xbf16>, vector<8x16xbf16>, vector<8x16xf32> -> vector<8x16xf32>
    %c0_6 = arith.constant 0 : index
    %c0_7 = arith.constant 0 : index
    %c0_8 = arith.constant 0 : index
    %23 = vector.load %arg2[%c0_6, %c0_7, %c0_8] : memref<1x8x32xf32, #tpu.memory_space<vmem>>, vector<1x8x16xf32>
    %24 = vector.shape_cast %23 : vector<1x8x16xf32> to vector<8x16xf32>
    %25 = vector.shape_cast %22 : vector<8x16xf32> to vector<1x8x16xf32>
    tpu.vector_store %arg2[%c0_6, %c0_7, %c0_8], %25 {strides = array<i32>} : memref<1x8x32xf32, #tpu.memory_space<vmem>>, vector<1x8x16xf32>,
    %26 = vector.extract_strided_slice %1 {offsets = [0, 16], sizes = [8, 16], strides = [1, 1]} : vector<8x96xf32> to vector<8x16xf32>
    %cst_9 = arith.constant 2.500000e-01 : f32
    %27 = vector.broadcast %cst_9 : f32 to vector<8x16xf32>
    %28 = arith.mulf %26, %27 : vector<8x16xf32>
    %29 = arith.truncf %28 : vector<8x16xf32> to vector<8x16xbf16>
    %30 = vector.extract_strided_slice %1 {offsets = [0, 48], sizes = [8, 16], strides = [1, 1]} : vector<8x96xf32> to vector<8x16xf32>
    %31 = arith.truncf %30 : vector<8x16xf32> to vector<8x16xbf16>
    %32 = vector.extract_strided_slice %1 {offsets = [0, 80], sizes = [8, 16], strides = [1, 1]} : vector<8x96xf32> to vector<8x16xf32>
    %33 = arith.truncf %32 : vector<8x16xf32> to vector<8x16xbf16>
    %cst_10 = arith.constant dense<0.000000e+00> : vector<8x8xf32>
    %34 = tpu.matmul %29, %31, %cst_10 {dimension_numbers = #tpu.dot_dimension_numbers<[1], [1], [0], [0], [0, 0, 1, 0], [], []>} : vector<8x16xbf16>, vector<8x16xbf16>, vector<8x8xf32> -> vector<8x8xf32>
    %cst_11 = arith.constant dense<0xFF800000> : vector<8xf32>
    %35 = vector.multi_reduction <maximumf>, %34, %cst_11 [1] : vector<8x8xf32> to vector<8xf32>
    %36 = vector.shape_cast %35 : vector<8xf32> to vector<8x1xf32>
    %37 = vector.broadcast %36 : vector<8x1xf32> to vector<8x8xf32>
    %38 = arith.subf %34, %37 : vector<8x8xf32>
    %39 = math.exp %38 : vector<8x8xf32>
    %cst_12 = arith.constant dense<0.000000e+00> : vector<8xf32>
    %40 = vector.multi_reduction <add>, %39, %cst_12 [1] : vector<8x8xf32> to vector<8xf32>
    %41 = vector.shape_cast %40 : vector<8xf32> to vector<8x1xf32>
    %42 = tpu.reciprocal %41 {approx = true} : vector<8x1xf32> -> vector<8x1xf32>
    %43 = vector.broadcast %42 : vector<8x1xf32> to vector<8x8xf32>
    %44 = arith.mulf %39, %43 : vector<8x8xf32>
    %45 = arith.truncf %44 : vector<8x8xf32> to vector<8x8xbf16>
    %cst_13 = arith.constant dense<0.000000e+00> : vector<8x16xf32>
    %46 = tpu.matmul %45, %33, %cst_13 {dimension_numbers = #tpu.dot_dimension_numbers<[1], [0], [0], [1], [0, 0, 1, 1], [], []>} : vector<8x8xbf16>, vector<8x16xbf16>, vector<8x16xf32> -> vector<8x16xf32>
    %c0_14 = arith.constant 0 : index
    %c0_15 = arith.constant 0 : index
    %c16 = arith.constant 16 : index
    %47 = vector.load %arg2[%c0_14, %c0_15, %c16] : memref<1x8x32xf32, #tpu.memory_space<vmem>>, vector<1x8x16xf32>
    %48 = vector.shape_cast %47 : vector<1x8x16xf32> to vector<8x16xf32>
    %49 = vector.shape_cast %46 : vector<8x16xf32> to vector<1x8x16xf32>
    tpu.vector_store %arg2[%c0_14, %c0_15, %c16], %49 {strides = array<i32>} : memref<1x8x32xf32, #tpu.memory_space<vmem>>, vector<1x8x16xf32>,
    return
  }
  func.func @transform_0(%arg0: i32) -> (i32, i32, i32) {
    %c0_i32 = arith.constant 0 : i32
    %c0_i32_0 = arith.constant 0 : i32
    %c0_i32_1 = arith.constant 0 : i32
    return %arg0, %c0_i32, %c0_i32_0 : i32, i32, i32
  }
  func.func @transform_1(%arg0: i32) -> (i32, i32, i32) {
    %c0_i32 = arith.constant 0 : i32
    %c0_i32_0 = arith.constant 0 : i32
    %c0_i32_1 = arith.constant 0 : i32
    return %arg0, %c0_i32, %c0_i32_0 : i32, i32, i32
  }
}

module attributes {stable_mosaic.version = 11 : i64} {
  func.func @_oproj_addln_kernel(%arg0: i32, %arg1: memref<16x32xf32, #tpu.memory_space<vmem>>, %arg2: memref<16x32xf32, #tpu.memory_space<vmem>>, %arg3: memref<32x32xf32, #tpu.memory_space<vmem>>, %arg4: memref<1x32xf32, #tpu.memory_space<vmem>>, %arg5: memref<1x32xf32, #tpu.memory_space<vmem>>, %arg6: memref<1x32xf32, #tpu.memory_space<vmem>>, %arg7: memref<16x32xf32, #tpu.memory_space<vmem>>) attributes {dimension_semantics = [#tpu.dimension_semantics<parallel>], iteration_bounds = array<i64: 1>, scalar_prefetch = 0 : i64, scratch_operands = 0 : i64, tpu.core_type = #tpu.core_type<tc>, window_params = [{transform_indices = @transform_0, window_bounds = array<i64: 16, 32>}, {transform_indices = @transform_1, window_bounds = array<i64: 16, 32>}, {pipeline_mode = #tpu.pipeline_mode<synchronous>, transform_indices = @transform_2, window_bounds = array<i64: 32, 32>}, {pipeline_mode = #tpu.pipeline_mode<synchronous>, transform_indices = @transform_3, window_bounds = array<i64: 1, 32>}, {pipeline_mode = #tpu.pipeline_mode<synchronous>, transform_indices = @transform_4, window_bounds = array<i64: 1, 32>}, {pipeline_mode = #tpu.pipeline_mode<synchronous>, transform_indices = @transform_5, window_bounds = array<i64: 1, 32>}, {transform_indices = @transform_6, window_bounds = array<i64: 16, 32>}]} {
    %c0 = arith.constant 0 : index
    %c0_0 = arith.constant 0 : index
    %0 = vector.load %arg2[%c0, %c0_0] : memref<16x32xf32, #tpu.memory_space<vmem>>, vector<16x32xf32>
    %1 = arith.truncf %0 : vector<16x32xf32> to vector<16x32xbf16>
    %c0_1 = arith.constant 0 : index
    %c0_2 = arith.constant 0 : index
    %2 = vector.load %arg3[%c0_1, %c0_2] : memref<32x32xf32, #tpu.memory_space<vmem>>, vector<32x32xf32>
    %3 = arith.truncf %2 : vector<32x32xf32> to vector<32x32xbf16>
    %cst = arith.constant dense<0.000000e+00> : vector<16x32xf32>
    %4 = tpu.matmul %1, %3, %cst {dimension_numbers = #tpu.dot_dimension_numbers<[1], [0], [0], [1], [0, 0, 1, 1], [], []>} : vector<16x32xbf16>, vector<32x32xbf16>, vector<16x32xf32> -> vector<16x32xf32>
    %c0_3 = arith.constant 0 : index
    %c0_4 = arith.constant 0 : index
    %5 = vector.load %arg4[%c0_3, %c0_4] : memref<1x32xf32, #tpu.memory_space<vmem>>, vector<1x32xf32>
    %6 = vector.broadcast %5 : vector<1x32xf32> to vector<16x32xf32>
    %7 = arith.addf %4, %6 : vector<16x32xf32>
    %c0_5 = arith.constant 0 : index
    %c0_6 = arith.constant 0 : index
    %8 = vector.load %arg1[%c0_5, %c0_6] : memref<16x32xf32, #tpu.memory_space<vmem>>, vector<16x32xf32>
    %9 = arith.addf %8, %7 : vector<16x32xf32>
    %cst_7 = arith.constant dense<0.000000e+00> : vector<16xf32>
    %10 = vector.multi_reduction <add>, %9, %cst_7 [1] : vector<16x32xf32> to vector<16xf32>
    %11 = vector.shape_cast %10 : vector<16xf32> to vector<16x1xf32>
    %cst_8 = arith.constant 3.200000e+01 : f32
    %12 = vector.broadcast %cst_8 : f32 to vector<16x1xf32>
    %13 = arith.divf %11, %12 : vector<16x1xf32>
    %14 = vector.broadcast %13 : vector<16x1xf32> to vector<16x32xf32>
    %15 = arith.subf %9, %14 : vector<16x32xf32>
    %16 = arith.mulf %15, %15 : vector<16x32xf32>
    %cst_9 = arith.constant dense<0.000000e+00> : vector<16xf32>
    %17 = vector.multi_reduction <add>, %16, %cst_9 [1] : vector<16x32xf32> to vector<16xf32>
    %18 = vector.shape_cast %17 : vector<16xf32> to vector<16x1xf32>
    %cst_10 = arith.constant 3.200000e+01 : f32
    %19 = vector.broadcast %cst_10 : f32 to vector<16x1xf32>
    %20 = arith.divf %18, %19 : vector<16x1xf32>
    %cst_11 = arith.constant 9.99999974E-6 : f32
    %21 = vector.broadcast %cst_11 : f32 to vector<16x1xf32>
    %22 = arith.addf %20, %21 : vector<16x1xf32>
    %23 = math.rsqrt %22 : vector<16x1xf32>
    %24 = vector.broadcast %23 : vector<16x1xf32> to vector<16x32xf32>
    %25 = arith.mulf %15, %24 : vector<16x32xf32>
    %c0_12 = arith.constant 0 : index
    %c0_13 = arith.constant 0 : index
    %26 = vector.load %arg5[%c0_12, %c0_13] : memref<1x32xf32, #tpu.memory_space<vmem>>, vector<1x32xf32>
    %27 = vector.broadcast %26 : vector<1x32xf32> to vector<16x32xf32>
    %28 = arith.mulf %25, %27 : vector<16x32xf32>
    %c0_14 = arith.constant 0 : index
    %c0_15 = arith.constant 0 : index
    %29 = vector.load %arg6[%c0_14, %c0_15] : memref<1x32xf32, #tpu.memory_space<vmem>>, vector<1x32xf32>
    %30 = vector.broadcast %29 : vector<1x32xf32> to vector<16x32xf32>
    %31 = arith.addf %28, %30 : vector<16x32xf32>
    %c0_16 = arith.constant 0 : index
    %c0_17 = arith.constant 0 : index
    %32 = vector.load %arg7[%c0_16, %c0_17] : memref<16x32xf32, #tpu.memory_space<vmem>>, vector<16x32xf32>
    tpu.vector_store %arg7[%c0_16, %c0_17], %31 {strides = array<i32>} : memref<16x32xf32, #tpu.memory_space<vmem>>, vector<16x32xf32>,
    return
  }
  func.func @transform_0(%arg0: i32) -> (i32, i32) {
    %c0_i32 = arith.constant 0 : i32
    %c0_i32_0 = arith.constant 0 : i32
    return %arg0, %c0_i32 : i32, i32
  }
  func.func @transform_1(%arg0: i32) -> (i32, i32) {
    %c0_i32 = arith.constant 0 : i32
    %c0_i32_0 = arith.constant 0 : i32
    return %arg0, %c0_i32 : i32, i32
  }
  func.func @transform_2(%arg0: i32) -> (i32, i32) {
    %c0_i32 = arith.constant 0 : i32
    %c0_i32_0 = arith.constant 0 : i32
    %c0_i32_1 = arith.constant 0 : i32
    return %c0_i32, %c0_i32_0 : i32, i32
  }
  func.func @transform_3(%arg0: i32) -> (i32, i32) {
    %c0_i32 = arith.constant 0 : i32
    %c0_i32_0 = arith.constant 0 : i32
    %c0_i32_1 = arith.constant 0 : i32
    return %c0_i32, %c0_i32_0 : i32, i32
  }
  func.func @transform_4(%arg0: i32) -> (i32, i32) {
    %c0_i32 = arith.constant 0 : i32
    %c0_i32_0 = arith.constant 0 : i32
    %c0_i32_1 = arith.constant 0 : i32
    return %c0_i32, %c0_i32_0 : i32, i32
  }
  func.func @transform_5(%arg0: i32) -> (i32, i32) {
    %c0_i32 = arith.constant 0 : i32
    %c0_i32_0 = arith.constant 0 : i32
    %c0_i32_1 = arith.constant 0 : i32
    return %c0_i32, %c0_i32_0 : i32, i32
  }
  func.func @transform_6(%arg0: i32) -> (i32, i32) {
    %c0_i32 = arith.constant 0 : i32
    %c0_i32_0 = arith.constant 0 : i32
    return %arg0, %c0_i32 : i32, i32
  }
}

module attributes {stable_mosaic.version = 11 : i64} {
  func.func @_ffn_addln_kernel(%arg0: i32, %arg1: i32, %arg2: memref<16x32xf32, #tpu.memory_space<vmem>>, %arg3: memref<32x64xf32, #tpu.memory_space<vmem>>, %arg4: memref<1x64xf32, #tpu.memory_space<vmem>>, %arg5: memref<64x32xf32, #tpu.memory_space<vmem>>, %arg6: memref<1x32xf32, #tpu.memory_space<vmem>>, %arg7: memref<1x32xf32, #tpu.memory_space<vmem>>, %arg8: memref<1x32xf32, #tpu.memory_space<vmem>>, %arg9: memref<16x32xf32, #tpu.memory_space<vmem>>, %arg10: memref<16x32xf32, #tpu.memory_space<vmem>>) attributes {dimension_semantics = [#tpu.dimension_semantics<parallel>, #tpu.dimension_semantics<arbitrary>], iteration_bounds = array<i64: 1, 1>, scalar_prefetch = 0 : i64, scratch_operands = 1 : i64, tpu.core_type = #tpu.core_type<tc>, window_params = [{transform_indices = @transform_0, window_bounds = array<i64: 16, 32>}, {transform_indices = @transform_1, window_bounds = array<i64: 32, 64>}, {transform_indices = @transform_2, window_bounds = array<i64: 1, 64>}, {transform_indices = @transform_3, window_bounds = array<i64: 64, 32>}, {pipeline_mode = #tpu.pipeline_mode<synchronous>, transform_indices = @transform_4, window_bounds = array<i64: 1, 32>}, {pipeline_mode = #tpu.pipeline_mode<synchronous>, transform_indices = @transform_5, window_bounds = array<i64: 1, 32>}, {pipeline_mode = #tpu.pipeline_mode<synchronous>, transform_indices = @transform_6, window_bounds = array<i64: 1, 32>}, {transform_indices = @transform_7, window_bounds = array<i64: 16, 32>}]} {
    %c0_i32 = arith.constant 0 : i32
    %0 = arith.cmpi eq, %arg1, %c0_i32 : i32
    %1 = arith.extui %0 : i1 to i32
    %c0_i32_0 = arith.constant 0 : i32
    %2 = arith.cmpi ne, %1, %c0_i32_0 : i32
    scf.if %2 {
      %cst_16 = arith.constant 0.000000e+00 : f32
      %23 = vector.broadcast %cst_16 : f32 to vector<16x32xf32>
      %c0_17 = arith.constant 0 : index
      %c0_18 = arith.constant 0 : index
      %24 = vector.load %arg10[%c0_17, %c0_18] : memref<16x32xf32, #tpu.memory_space<vmem>>, vector<16x32xf32>
      tpu.vector_store %arg10[%c0_17, %c0_18], %23 {strides = array<i32>} : memref<16x32xf32, #tpu.memory_space<vmem>>, vector<16x32xf32>,
    } else {
    }
    %c0 = arith.constant 0 : index
    %c0_1 = arith.constant 0 : index
    %3 = vector.load %arg2[%c0, %c0_1] : memref<16x32xf32, #tpu.memory_space<vmem>>, vector<16x32xf32>
    %4 = arith.truncf %3 : vector<16x32xf32> to vector<16x32xbf16>
    %c0_2 = arith.constant 0 : index
    %c0_3 = arith.constant 0 : index
    %5 = vector.load %arg3[%c0_2, %c0_3] : memref<32x64xf32, #tpu.memory_space<vmem>>, vector<32x64xf32>
    %6 = arith.truncf %5 : vector<32x64xf32> to vector<32x64xbf16>
    %cst = arith.constant dense<0.000000e+00> : vector<16x64xf32>
    %7 = tpu.matmul %4, %6, %cst {dimension_numbers = #tpu.dot_dimension_numbers<[1], [0], [0], [1], [0, 0, 1, 1], [], []>} : vector<16x32xbf16>, vector<32x64xbf16>, vector<16x64xf32> -> vector<16x64xf32>
    %c0_4 = arith.constant 0 : index
    %c0_5 = arith.constant 0 : index
    %8 = vector.load %arg4[%c0_4, %c0_5] : memref<1x64xf32, #tpu.memory_space<vmem>>, vector<1x64xf32>
    %9 = vector.broadcast %8 : vector<1x64xf32> to vector<16x64xf32>
    %10 = arith.addf %7, %9 : vector<16x64xf32>
    %cst_6 = arith.constant 0.000000e+00 : f32
    %11 = vector.broadcast %cst_6 : f32 to vector<16x64xf32>
    %12 = arith.maximumf %10, %11 : vector<16x64xf32>
    %c0_7 = arith.constant 0 : index
    %c0_8 = arith.constant 0 : index
    %13 = vector.load %arg10[%c0_7, %c0_8] : memref<16x32xf32, #tpu.memory_space<vmem>>, vector<16x32xf32>
    %14 = arith.truncf %12 : vector<16x64xf32> to vector<16x64xbf16>
    %c0_9 = arith.constant 0 : index
    %c0_10 = arith.constant 0 : index
    %15 = vector.load %arg5[%c0_9, %c0_10] : memref<64x32xf32, #tpu.memory_space<vmem>>, vector<64x32xf32>
    %16 = arith.truncf %15 : vector<64x32xf32> to vector<64x32xbf16>
    %cst_11 = arith.constant dense<0.000000e+00> : vector<16x32xf32>
    %17 = tpu.matmul %14, %16, %cst_11 {dimension_numbers = #tpu.dot_dimension_numbers<[1], [0], [0], [1], [0, 0, 1, 1], [], []>} : vector<16x64xbf16>, vector<64x32xbf16>, vector<16x32xf32> -> vector<16x32xf32>
    %18 = arith.addf %13, %17 : vector<16x32xf32>
    %c0_12 = arith.constant 0 : index
    %c0_13 = arith.constant 0 : index
    %19 = vector.load %arg10[%c0_12, %c0_13] : memref<16x32xf32, #tpu.memory_space<vmem>>, vector<16x32xf32>
    tpu.vector_store %arg10[%c0_12, %c0_13], %18 {strides = array<i32>} : memref<16x32xf32, #tpu.memory_space<vmem>>, vector<16x32xf32>,
    %c0_i32_14 = arith.constant 0 : i32
    %20 = arith.cmpi eq, %arg1, %c0_i32_14 : i32
    %21 = arith.extui %20 : i1 to i32
    %c0_i32_15 = arith.constant 0 : i32
    %22 = arith.cmpi ne, %21, %c0_i32_15 : i32
    scf.if %22 {
      %c0_16 = arith.constant 0 : index
      %c0_17 = arith.constant 0 : index
      %23 = vector.load %arg10[%c0_16, %c0_17] : memref<16x32xf32, #tpu.memory_space<vmem>>, vector<16x32xf32>
      %24 = arith.addf %3, %23 : vector<16x32xf32>
      %c0_18 = arith.constant 0 : index
      %c0_19 = arith.constant 0 : index
      %25 = vector.load %arg6[%c0_18, %c0_19] : memref<1x32xf32, #tpu.memory_space<vmem>>, vector<1x32xf32>
      %26 = vector.broadcast %25 : vector<1x32xf32> to vector<16x32xf32>
      %27 = arith.addf %24, %26 : vector<16x32xf32>
      %cst_20 = arith.constant dense<0.000000e+00> : vector<16xf32>
      %28 = vector.multi_reduction <add>, %27, %cst_20 [1] : vector<16x32xf32> to vector<16xf32>
      %29 = vector.shape_cast %28 : vector<16xf32> to vector<16x1xf32>
      %cst_21 = arith.constant 3.200000e+01 : f32
      %30 = vector.broadcast %cst_21 : f32 to vector<16x1xf32>
      %31 = arith.divf %29, %30 : vector<16x1xf32>
      %32 = vector.broadcast %31 : vector<16x1xf32> to vector<16x32xf32>
      %33 = arith.subf %27, %32 : vector<16x32xf32>
      %34 = arith.mulf %33, %33 : vector<16x32xf32>
      %cst_22 = arith.constant dense<0.000000e+00> : vector<16xf32>
      %35 = vector.multi_reduction <add>, %34, %cst_22 [1] : vector<16x32xf32> to vector<16xf32>
      %36 = vector.shape_cast %35 : vector<16xf32> to vector<16x1xf32>
      %cst_23 = arith.constant 3.200000e+01 : f32
      %37 = vector.broadcast %cst_23 : f32 to vector<16x1xf32>
      %38 = arith.divf %36, %37 : vector<16x1xf32>
      %cst_24 = arith.constant 9.99999974E-6 : f32
      %39 = vector.broadcast %cst_24 : f32 to vector<16x1xf32>
      %40 = arith.addf %38, %39 : vector<16x1xf32>
      %41 = math.rsqrt %40 : vector<16x1xf32>
      %42 = vector.broadcast %41 : vector<16x1xf32> to vector<16x32xf32>
      %43 = arith.mulf %33, %42 : vector<16x32xf32>
      %c0_25 = arith.constant 0 : index
      %c0_26 = arith.constant 0 : index
      %44 = vector.load %arg7[%c0_25, %c0_26] : memref<1x32xf32, #tpu.memory_space<vmem>>, vector<1x32xf32>
      %45 = vector.broadcast %44 : vector<1x32xf32> to vector<16x32xf32>
      %46 = arith.mulf %43, %45 : vector<16x32xf32>
      %c0_27 = arith.constant 0 : index
      %c0_28 = arith.constant 0 : index
      %47 = vector.load %arg8[%c0_27, %c0_28] : memref<1x32xf32, #tpu.memory_space<vmem>>, vector<1x32xf32>
      %48 = vector.broadcast %47 : vector<1x32xf32> to vector<16x32xf32>
      %49 = arith.addf %46, %48 : vector<16x32xf32>
      %c0_29 = arith.constant 0 : index
      %c0_30 = arith.constant 0 : index
      %50 = vector.load %arg9[%c0_29, %c0_30] : memref<16x32xf32, #tpu.memory_space<vmem>>, vector<16x32xf32>
      tpu.vector_store %arg9[%c0_29, %c0_30], %49 {strides = array<i32>} : memref<16x32xf32, #tpu.memory_space<vmem>>, vector<16x32xf32>,
    } else {
    }
    return
  }
  func.func @transform_0(%arg0: i32, %arg1: i32) -> (i32, i32) {
    %c0_i32 = arith.constant 0 : i32
    %c0_i32_0 = arith.constant 0 : i32
    return %arg0, %c0_i32 : i32, i32
  }
  func.func @transform_1(%arg0: i32, %arg1: i32) -> (i32, i32) {
    %c0_i32 = arith.constant 0 : i32
    %c0_i32_0 = arith.constant 0 : i32
    return %c0_i32, %arg1 : i32, i32
  }
  func.func @transform_2(%arg0: i32, %arg1: i32) -> (i32, i32) {
    %c0_i32 = arith.constant 0 : i32
    %c0_i32_0 = arith.constant 0 : i32
    return %c0_i32, %arg1 : i32, i32
  }
  func.func @transform_3(%arg0: i32, %arg1: i32) -> (i32, i32) {
    %c0_i32 = arith.constant 0 : i32
    %c0_i32_0 = arith.constant 0 : i32
    return %arg1, %c0_i32 : i32, i32
  }
  func.func @transform_4(%arg0: i32, %arg1: i32) -> (i32, i32) {
    %c0_i32 = arith.constant 0 : i32
    %c0_i32_0 = arith.constant 0 : i32
    %c0_i32_1 = arith.constant 0 : i32
    return %c0_i32, %c0_i32_0 : i32, i32
  }
  func.func @transform_5(%arg0: i32, %arg1: i32) -> (i32, i32) {
    %c0_i32 = arith.constant 0 : i32
    %c0_i32_0 = arith.constant 0 : i32
    %c0_i32_1 = arith.constant 0 : i32
    return %c0_i32, %c0_i32_0 : i32, i32
  }
  func.func @transform_6(%arg0: i32, %arg1: i32) -> (i32, i32) {
    %c0_i32 = arith.constant 0 : i32
    %c0_i32_0 = arith.constant 0 : i32
    %c0_i32_1 = arith.constant 0 : i32
    return %c0_i32, %c0_i32_0 : i32, i32
  }
  func.func @transform_7(%arg0: i32, %arg1: i32) -> (i32, i32) {
    %c0_i32 = arith.constant 0 : i32
    %c0_i32_0 = arith.constant 0 : i32
    return %arg0, %c0_i32 : i32, i32
  }
}

module attributes {stable_mosaic.version = 11 : i64} {
  func.func @_linear_kernel(%arg0: i32, %arg1: i32, %arg2: i32, %arg3: memref<16x32xf32, #tpu.memory_space<vmem>>, %arg4: memref<32x16xf32, #tpu.memory_space<vmem>>, %arg5: memref<1x16xf32, #tpu.memory_space<vmem>>, %arg6: memref<16x16xf32, #tpu.memory_space<vmem>>, %arg7: memref<16x16xf32, #tpu.memory_space<vmem>>) attributes {dimension_semantics = [#tpu.dimension_semantics<parallel>, #tpu.dimension_semantics<parallel>, #tpu.dimension_semantics<arbitrary>], iteration_bounds = array<i64: 1, 1, 1>, scalar_prefetch = 0 : i64, scratch_operands = 1 : i64, tpu.core_type = #tpu.core_type<tc>, window_params = [{transform_indices = @transform_0, window_bounds = array<i64: 16, 32>}, {transform_indices = @transform_1, window_bounds = array<i64: 32, 16>}, {transform_indices = @transform_2, window_bounds = array<i64: 1, 16>}, {transform_indices = @transform_3, window_bounds = array<i64: 16, 16>}]} {
    %c0_i32 = arith.constant 0 : i32
    %0 = arith.cmpi eq, %arg2, %c0_i32 : i32
    %1 = arith.extui %0 : i1 to i32
    %c0_i32_0 = arith.constant 0 : i32
    %2 = arith.cmpi ne, %1, %c0_i32_0 : i32
    scf.if %2 {
      %cst_10 = arith.constant 0.000000e+00 : f32
      %14 = vector.broadcast %cst_10 : f32 to vector<16x16xf32>
      %c0_11 = arith.constant 0 : index
      %c0_12 = arith.constant 0 : index
      %15 = vector.load %arg7[%c0_11, %c0_12] : memref<16x16xf32, #tpu.memory_space<vmem>>, vector<16x16xf32>
      tpu.vector_store %arg7[%c0_11, %c0_12], %14 {strides = array<i32>} : memref<16x16xf32, #tpu.memory_space<vmem>>, vector<16x16xf32>,
    } else {
    }
    %c0 = arith.constant 0 : index
    %c0_1 = arith.constant 0 : index
    %3 = vector.load %arg7[%c0, %c0_1] : memref<16x16xf32, #tpu.memory_space<vmem>>, vector<16x16xf32>
    %c0_2 = arith.constant 0 : index
    %c0_3 = arith.constant 0 : index
    %4 = vector.load %arg3[%c0_2, %c0_3] : memref<16x32xf32, #tpu.memory_space<vmem>>, vector<16x32xf32>
    %5 = arith.truncf %4 : vector<16x32xf32> to vector<16x32xbf16>
    %c0_4 = arith.constant 0 : index
    %c0_5 = arith.constant 0 : index
    %6 = vector.load %arg4[%c0_4, %c0_5] : memref<32x16xf32, #tpu.memory_space<vmem>>, vector<32x16xf32>
    %7 = arith.truncf %6 : vector<32x16xf32> to vector<32x16xbf16>
    %cst = arith.constant dense<0.000000e+00> : vector<16x16xf32>
    %8 = tpu.matmul %5, %7, %cst {dimension_numbers = #tpu.dot_dimension_numbers<[1], [0], [0], [1], [0, 0, 1, 1], [], []>} : vector<16x32xbf16>, vector<32x16xbf16>, vector<16x16xf32> -> vector<16x16xf32>
    %9 = arith.addf %3, %8 : vector<16x16xf32>
    %c0_6 = arith.constant 0 : index
    %c0_7 = arith.constant 0 : index
    %10 = vector.load %arg7[%c0_6, %c0_7] : memref<16x16xf32, #tpu.memory_space<vmem>>, vector<16x16xf32>
    tpu.vector_store %arg7[%c0_6, %c0_7], %9 {strides = array<i32>} : memref<16x16xf32, #tpu.memory_space<vmem>>, vector<16x16xf32>,
    %c0_i32_8 = arith.constant 0 : i32
    %11 = arith.cmpi eq, %arg2, %c0_i32_8 : i32
    %12 = arith.extui %11 : i1 to i32
    %c0_i32_9 = arith.constant 0 : i32
    %13 = arith.cmpi ne, %12, %c0_i32_9 : i32
    scf.if %13 {
      %c0_10 = arith.constant 0 : index
      %c0_11 = arith.constant 0 : index
      %14 = vector.load %arg7[%c0_10, %c0_11] : memref<16x16xf32, #tpu.memory_space<vmem>>, vector<16x16xf32>
      %c0_12 = arith.constant 0 : index
      %c0_13 = arith.constant 0 : index
      %15 = vector.load %arg5[%c0_12, %c0_13] : memref<1x16xf32, #tpu.memory_space<vmem>>, vector<1x16xf32>
      %16 = vector.broadcast %15 : vector<1x16xf32> to vector<16x16xf32>
      %17 = arith.addf %14, %16 : vector<16x16xf32>
      %c0_14 = arith.constant 0 : index
      %c0_15 = arith.constant 0 : index
      %18 = vector.load %arg6[%c0_14, %c0_15] : memref<16x16xf32, #tpu.memory_space<vmem>>, vector<16x16xf32>
      tpu.vector_store %arg6[%c0_14, %c0_15], %17 {strides = array<i32>} : memref<16x16xf32, #tpu.memory_space<vmem>>, vector<16x16xf32>,
    } else {
    }
    return
  }
  func.func @transform_0(%arg0: i32, %arg1: i32, %arg2: i32) -> (i32, i32) {
    %c0_i32 = arith.constant 0 : i32
    return %arg0, %arg2 : i32, i32
  }
  func.func @transform_1(%arg0: i32, %arg1: i32, %arg2: i32) -> (i32, i32) {
    %c0_i32 = arith.constant 0 : i32
    return %arg2, %arg1 : i32, i32
  }
  func.func @transform_2(%arg0: i32, %arg1: i32, %arg2: i32) -> (i32, i32) {
    %c0_i32 = arith.constant 0 : i32
    %c0_i32_0 = arith.constant 0 : i32
    return %c0_i32, %arg1 : i32, i32
  }
  func.func @transform_3(%arg0: i32, %arg1: i32, %arg2: i32) -> (i32, i32) {
    %c0_i32 = arith.constant 0 : i32
    return %arg0, %arg1 : i32, i32
  }
}

</mosaic_0001>

<llo_original>
// kernel: transformer_forward.11
$region0: #{transformer_forward.11}
  #allocation0 [shape = 'u32[]', space=smem, size = 0x4, offset = 0x4, fixed_abs, tag = 'smem constant byte address 0x4 - core index']
  #allocation1 [shape = 'u32[144,128]{1,0:T(1,128)}', space=vmem, size = 0x12000, scoped, tag = 'internal scratch']
  #allocation2 [shape = 'f32[16,96]{1,0:T(8,128)}', space=vmem, size = 0x2000, scoped, tag = 'scratch operand']
  %s0 = inlined_call_operand.vmem [shape: f32[16,32], index: 0, kind: input, shape index: {}]
  %s1 = inlined_call_operand.vmem [shape: f32[32,96], index: 1, kind: input, shape index: {}]
  %s2 = inlined_call_operand.vmem [shape: f32[1,96], index: 2, kind: input, shape index: {}]
  %s3 = inlined_call_operand.vmem [shape: f32[16,96], index: 3, kind: output, shape index: {}]
  %s4 = sld [smem:[#allocation0]]
  $region30: #{transformer_forward.11} parent=0
    _
  %s6 = ssub.s32 1, %s4
  %s7 = scalar_select 0, %s6, %s4
  // Predicated region
  $region2: #{transformer_forward.11} parent=0 // pred_check
    _
  $region3: #{transformer_forward.11} parent=0 // pred_check_branch
    %9 = sbr.rel (0) target = $region5
  $region4: #{transformer_forward.11} parent=0 // pred_region
    _
  $region5: #{transformer_forward.11} parent=0 // pred_fallthru
    _
  // Predicated region
  $region6: #{transformer_forward.11} parent=0 // pred_check
    _
  $region7: #{transformer_forward.11} parent=0 // pred_check_branch
    %11 = sbr.rel (0) target = $region9
  $region8: #{transformer_forward.11} parent=0 // pred_region
    _
  $region9: #{transformer_forward.11} parent=0 // pred_fallthru
    _
  // Predicated region
  $region10: #{transformer_forward.11} parent=0 // pred_check
    _
  $region11: #{transformer_forward.11} parent=0 // pred_check_branch
    %13 = sbr.rel (0) target = $region13
  $region12: #{transformer_forward.11} parent=0 // pred_region
    _
  $region13: #{transformer_forward.11} parent=0 // pred_fallthru
    _
  %p15 = scmp.eq.s32.totalorder 0, 0
  // Predicated region
  $region14: #{transformer_forward.11} parent=0 // pred_check
    %p16 = pneg %p15
  $region15: #{transformer_forward.11} parent=0 // pred_check_branch
    %18 = sbr.rel (%p16) target = $region17
  $region16: #{transformer_forward.11} parent=0 // pred_region
    %vm19 = vcmask 785408
    %20 = vst.msk [vmem:[#allocation2] sm:$0xff] %vm19, 0.0
    %21 = vst.msk [vmem:[#allocation2 + $0x8] sm:$0xff] %vm19, 0.0
  $region17: #{transformer_forward.11} parent=0 // pred_fallthru
    _
  %v22 = vld [vmem:[#allocation2] sm:$0xff]
  %v23 = vld [vmem:[#allocation2 + $0x8] sm:$0xff]
  %v24 = vld [vmem:[%s0] sm:$0xff]
  %v25 = vld [vmem:[%s0 + $0x8] sm:$0xff]
  %v26 = vpack.c.bf16 %v25, %v24
  %v27 = vld [vmem:[%s1] sm:$0xff]
  %v28 = vld [vmem:[%s1 + $0x8] sm:$0xff]
  %v29 = vld [vmem:[%s1 + $0x10] sm:$0xff]
  %v30 = vld [vmem:[%s1 + $0x18] sm:$0xff]
  %v31 = vpack.c.bf16 %v28, %v27
  %v32 = vpack.c.bf16 %v30, %v29
  %vm33 = vcmask 261120
  %v35 = vsel %vm33, %v26, 0
  %37 = vmatprep.subr.bf16.mxu0 0
  %38 = vmatpush1.bf16.msra.mxu0 0
  %39 = vmatprep.subr.bf16.mxu0 0
  %40 = vmatpush1.bf16.msra.mxu0 0
  %41 = vmatprep.subr.bf16.mxu0 0
  %42 = vmatpush1.bf16.msra.mxu0 0
  %43 = vmatprep.subr.bf16.mxu0 0
  %44 = vmatpush1.bf16.msra.mxu0 0
  %45 = vmatprep.subr.bf16.mxu0 0
  %46 = vmatpush1.bf16.msra.mxu0 0
  %47 = vmatprep.subr.bf16.mxu0 0
  %48 = vmatpush1.bf16.msra.mxu0 0
  %49 = vmatprep.subr.bf16.mxu0 0
  %50 = vmatpush1.bf16.msra.mxu0 %v32
  %51 = vmatprep.subr.bf16.mxu0 0
  %52 = vmatpush1.bf16.msra.mxu0 %v31
  %53 = vmatprep.subr.bf16.mxu0 0
  %54 = vmatpush2.bf16.msra.mxu0 0
  %55 = vmatprep.subr.bf16.mxu0 0
  %56 = vmatpush2.bf16.msra.mxu0 0
  %57 = vmatprep.subr.bf16.mxu0 0
  %58 = vmatpush2.bf16.msra.mxu0 0
  %59 = vmatprep.subr.bf16.mxu0 0
  %60 = vmatpush2.bf16.msra.mxu0 0
  %61 = vmatprep.subr.bf16.mxu0 0
  %62 = vmatpush2.bf16.msra.mxu0 0
  %63 = vmatprep.subr.bf16.mxu0 0
  %64 = vmatpush2.bf16.msra.mxu0 0
  %65 = vmatprep.subr.bf16.mxu0 0
  %66 = vmatpush2.bf16.msra.mxu0 0
  %67 = vmatprep.subr.bf16.mxu0 0
  %68 = vmatpush2.bf16.msra.mxu0 0
  %69 = vmatprep.mubr.bf16.mxu0 0
  %70 = vmatmul.mubr.bf16.gmra.mxu0 %v35
  %v71 = vpop.f32.mrf.mxu0
  %v72 = vadd.f32 0.0, %v71
  %v73 = vpop.f32.mrf.mxu0
  %v74 = vpop.f32.mrf.mxu0
  %v75 = vadd.f32 0.0, %v74
  %v76 = vpop.f32.mrf.mxu0
  %77 = vdwg.mxu0
  %v78 = vadd.f32 %v22, %v72
  %v79 = vadd.f32 %v23, %v75
  %vm80 = vcmask 785408
  %81 = vst.msk [vmem:[#allocation2] sm:$0xff] %vm80, %v78
  %82 = vst.msk [vmem:[#allocation2 + $0x8] sm:$0xff] %vm80, %v79
  // Predicated region
  $region18: #{transformer_forward.11} parent=0 // pred_check
    %p83 = pneg %p15
  $region19: #{transformer_forward.11} parent=0 // pred_check_branch
    %85 = sbr.rel (%p83) target = $region21
  $region20: #{transformer_forward.11} parent=0 // pred_region
    %v86 = vld [vmem:[#allocation2] sm:$0xff]
    %v87 = vld [vmem:[#allocation2 + $0x8] sm:$0xff]
    %v88 = vld [vmem:[%s2] sm:$0x1]
    %v90 = vlaneseq
    %v91 = vshrl.u32 %v90, 7
    %v92 = vsub.s32 0, %v91
    %v93 = vrot.slane %v88, %v92
    %v95 = vadd.f32 %v86, %v93
    %v96 = vadd.f32 %v87, %v93
    %97 = vst.msk [vmem:[%s3] sm:$0xff] %vm80, %v95
    %98 = vst.msk [vmem:[%s3 + $0x8] sm:$0xff] %vm80, %v96
  $region21: #{transformer_forward.11} parent=0 // pred_fallthru
    _
  // Predicated region
  $region22: #{transformer_forward.11} parent=0 // pred_check
    _
  $region23: #{transformer_forward.11} parent=0 // pred_check_branch
    %100 = sbr.rel (0) target = $region25
  $region24: #{transformer_forward.11} parent=0 // pred_region
    _
  $region25: #{transformer_forward.11} parent=0 // pred_fallthru
    _
  // Predicated region
  $region26: #{transformer_forward.11} parent=0 // pred_check
    _
  $region27: #{transformer_forward.11} parent=0 // pred_check_branch
    %102 = sbr.rel (0) target = $region29
  $region28: #{transformer_forward.11} parent=0 // pred_region
    _
  $region29: #{transformer_forward.11} parent=0 // pred_fallthru
    _

// kernel: transformer_forward.10
$region0: #{transformer_forward.10}
  #allocation0 [shape = 'u32[]', space=smem, size = 0x4, offset = 0x4, fixed_abs, tag = 'smem constant byte address 0x4 - core index']
  #allocation1 [shape = 'u32[144,128]{1,0:T(1,128)}', space=vmem, size = 0x12000, scoped, tag = 'internal scratch']
  #allocation2 [shape = 'f32[16,32]{1,0:T(8,128)}', space=vmem, size = 0x2000, scoped, tag = 'scratch operand']
  %s0 = inlined_call_operand.vmem [shape: f32[16,16], index: 0, kind: input, shape index: {}]
  %s1 = inlined_call_operand.vmem [shape: f32[16,32], index: 1, kind: input, shape index: {}]
  %s2 = inlined_call_operand.vmem [shape: f32[1,32], index: 2, kind: input, shape index: {}]
  %s3 = inlined_call_operand.vmem [shape: f32[16,32], index: 3, kind: input, shape index: {}]
  %s4 = inlined_call_operand.vmem [shape: f32[16,32], index: 4, kind: output, shape index: {}]
  %s5 = sld [smem:[#allocation0]]
  $region34: #{transformer_forward.10} parent=0
    _
  %s7 = ssub.s32 1, %s5
  %s8 = scalar_select 0, %s7, %s5
  // Predicated region
  $region2: #{transformer_forward.10} parent=0 // pred_check
    _
  $region3: #{transformer_forward.10} parent=0 // pred_check_branch
    %10 = sbr.rel (0) target = $region5
  $region4: #{transformer_forward.10} parent=0 // pred_region
    _
  $region5: #{transformer_forward.10} parent=0 // pred_fallthru
    _
  // Predicated region
  $region6: #{transformer_forward.10} parent=0 // pred_check
    _
  $region7: #{transformer_forward.10} parent=0 // pred_check_branch
    %12 = sbr.rel (0) target = $region9
  $region8: #{transformer_forward.10} parent=0 // pred_region
    _
  $region9: #{transformer_forward.10} parent=0 // pred_fallthru
    _
  // Predicated region
  $region10: #{transformer_forward.10} parent=0 // pred_check
    _
  $region11: #{transformer_forward.10} parent=0 // pred_check_branch
    %14 = sbr.rel (0) target = $region13
  $region12: #{transformer_forward.10} parent=0 // pred_region
    _
  $region13: #{transformer_forward.10} parent=0 // pred_fallthru
    _
  // Predicated region
  $region14: #{transformer_forward.10} parent=0 // pred_check
    _
  $region15: #{transformer_forward.10} parent=0 // pred_check_branch
    %16 = sbr.rel (0) target = $region17
  $region16: #{transformer_forward.10} parent=0 // pred_region
    _
  $region17: #{transformer_forward.10} parent=0 // pred_fallthru
    _
  %p18 = scmp.eq.s32.totalorder 0, 0
  // Predicated region
  $region18: #{transformer_forward.10} parent=0 // pred_check
    %p19 = pneg %p18
  $region19: #{transformer_forward.10} parent=0 // pred_check_branch
    %21 = sbr.rel (%p19) target = $region21
  $region20: #{transformer_forward.10} parent=0 // pred_region
    %vm22 = vcmask 261120
    %23 = vst.msk [vmem:[#allocation2] sm:$0xff] %vm22, 0.0
    %24 = vst.msk [vmem:[#allocation2 + $0x8] sm:$0xff] %vm22, 0.0
  $region21: #{transformer_forward.10} parent=0 // pred_fallthru
    _
  %v25 = vld [vmem:[#allocation2] sm:$0xff]
  %v26 = vld [vmem:[#allocation2 + $0x8] sm:$0xff]
  %v27 = vld [vmem:[%s0] sm:$0xff]
  %v28 = vld [vmem:[%s0 + $0x8] sm:$0xff]
  %v29 = vpack.c.bf16 %v28, %v27
  %v30 = vld [vmem:[%s1] sm:$0xff]
  %v31 = vld [vmem:[%s1 + $0x8] sm:$0xff]
  %v32 = vpack.c.bf16 %v31, %v30
  %vm33 = vcmask 130048
  %v35 = vsel %vm33, %v29, 0
  %37 = vmatprep.subr.bf16.mxu0 0
  %38 = vmatpush1.bf16.msra.mxu0 0
  %39 = vmatprep.subr.bf16.mxu0 0
  %40 = vmatpush1.bf16.msra.mxu0 0
  %41 = vmatprep.subr.bf16.mxu0 0
  %42 = vmatpush1.bf16.msra.mxu0 0
  %43 = vmatprep.subr.bf16.mxu0 0
  %44 = vmatpush1.bf16.msra.mxu0 0
  %45 = vmatprep.subr.bf16.mxu0 0
  %46 = vmatpush1.bf16.msra.mxu0 0
  %47 = vmatprep.subr.bf16.mxu0 0
  %48 = vmatpush1.bf16.msra.mxu0 0
  %49 = vmatprep.subr.bf16.mxu0 0
  %50 = vmatpush1.bf16.msra.mxu0 0
  %51 = vmatprep.subr.bf16.mxu0 0
  %52 = vmatpush1.bf16.msra.mxu0 %v32
  %53 = vmatprep.subr.bf16.mxu0 0
  %54 = vmatpush2.bf16.msra.mxu0 0
  %55 = vmatprep.subr.bf16.mxu0 0
  %56 = vmatpush2.bf16.msra.mxu0 0
  %57 = vmatprep.subr.bf16.mxu0 0
  %58 = vmatpush2.bf16.msra.mxu0 0
  %59 = vmatprep.subr.bf16.mxu0 0
  %60 = vmatpush2.bf16.msra.mxu0 0
  %61 = vmatprep.subr.bf16.mxu0 0
  %62 = vmatpush2.bf16.msra.mxu0 0
  %63 = vmatprep.subr.bf16.mxu0 0
  %64 = vmatpush2.bf16.msra.mxu0 0
  %65 = vmatprep.subr.bf16.mxu0 0
  %66 = vmatpush2.bf16.msra.mxu0 0
  %67 = vmatprep.subr.bf16.mxu0 0
  %68 = vmatpush2.bf16.msra.mxu0 0
  %69 = vmatprep.mubr.bf16.mxu0 0
  %70 = vmatmul.mubr.bf16.gmra.mxu0 %v35
  %v71 = vpop.f32.mrf.mxu0
  %v72 = vadd.f32 0.0, %v71
  %v73 = vpop.f32.mrf.mxu0
  %v74 = vpop.f32.mrf.mxu0
  %v75 = vadd.f32 0.0, %v74
  %v76 = vpop.f32.mrf.mxu0
  %77 = vdwg.mxu0
  %v78 = vadd.f32 %v25, %v72
  %v79 = vadd.f32 %v26, %v75
  %vm80 = vcmask 261120
  %81 = vst.msk [vmem:[#allocation2] sm:$0xff] %vm80, %v78
  %82 = vst.msk [vmem:[#allocation2 + $0x8] sm:$0xff] %vm80, %v79
  // Predicated region
  $region22: #{transformer_forward.10} parent=0 // pred_check
    %p83 = pneg %p18
  $region23: #{transformer_forward.10} parent=0 // pred_check_branch
    %85 = sbr.rel (%p83) target = $region25
  $region24: #{transformer_forward.10} parent=0 // pred_region
    %v86 = vld [vmem:[#allocation2] sm:$0xff]
    %v87 = vld [vmem:[#allocation2 + $0x8] sm:$0xff]
    %v88 = vld [vmem:[%s2] sm:$0x1]
    %v90 = vlaneseq
    %v91 = vshrl.u32 %v90, 7
    %v92 = vsub.s32 0, %v91
    %v93 = vrot.slane %v88, %v92
    %v95 = vadd.f32 %v86, %v93
    %v96 = vadd.f32 %v87, %v93
    %v97 = vld [vmem:[%s3] sm:$0xff]
    %v98 = vld [vmem:[%s3 + $0x8] sm:$0xff]
    %v99 = vadd.f32 %v95, %v97
    %v100 = vadd.f32 %v96, %v98
    %101 = vst.msk [vmem:[%s4] sm:$0xff] %vm80, %v99
    %102 = vst.msk [vmem:[%s4 + $0x8] sm:$0xff] %vm80, %v100
  $region25: #{transformer_forward.10} parent=0 // pred_fallthru
    _
  // Predicated region
  $region26: #{transformer_forward.10} parent=0 // pred_check
    _
  $region27: #{transformer_forward.10} parent=0 // pred_check_branch
    %104 = sbr.rel (0) target = $region29
  $region28: #{transformer_forward.10} parent=0 // pred_region
    _
  $region29: #{transformer_forward.10} parent=0 // pred_fallthru
    _
  // Predicated region
  $region30: #{transformer_forward.10} parent=0 // pred_check
    _
  $region31: #{transformer_forward.10} parent=0 // pred_check_branch
    %106 = sbr.rel (0) target = $region33
  $region32: #{transformer_forward.10} parent=0 // pred_region
    _
  $region33: #{transformer_forward.10} parent=0 // pred_fallthru
    _

// kernel: transformer_forward.12
$region0: #{transformer_forward.12}
  #allocation0 [shape = 'u32[]', space=smem, size = 0x4, offset = 0x4, fixed_abs, tag = 'smem constant byte address 0x4 - core index']
  #allocation1 [shape = 'u32[144,128]{1,0:T(1,128)}', space=vmem, size = 0x12000, scoped, tag = 'internal scratch']
  %s0 = inlined_call_operand.vmem [shape: f32[2,8,96], index: 0, kind: input, shape index: {}]
  %s1 = inlined_call_operand.vmem [shape: f32[2,8,32], index: 1, kind: output, shape index: {}]
  %s2 = sld [smem:[#allocation0]]
  $region37: #{transformer_forward.12} parent=0
    _
  %s4 = ssub.s32 1, %s2
  %s5 = scalar_select 0, %s4, %s2
  loop: start=0, step=1, limit=4
  $region2: #{transformer_forward.12} parent=0 // loop_pre_header
    _
  $region3: #{transformer_forward.12} parent=0 // loop_header
    %s7 = sphi 0, %s11
    %p8 = scmp.ge.s32.totalorder %s7, 4
    %s17 = sphi 0, %s19
    %s20 = sphi 0, %s17
    %s21 = sphi 0, %s20
    %s37 = sphi 0, %s21
    %s43 = sphi 0, %s45
    %s46 = sphi 0, %s43
    %s47 = sphi 0, %s46
    %s63 = sphi 0, %s47
  $region4: #{transformer_forward.12} parent=0 // loop_header_branch
    %10 = sbr.rel (%p8) target = $region8
  $region5: #{transformer_forward.12} parent=0 // loop_body
    %s12 = ssub.s32 %s7, 1
    %s13 = ssub.s32 %s7, 2
    %s14 = sadd.s32 %s7, 1
    %s15 = ssub.s32 %s7, %s14
    %p16 = scmp.eq.s32.totalorder %s15, 0
    %s18 = sadd.s32 %s17, 1
    %s19 = scalar_select %p16, %s17, %s18
    %p22 = pneg %p16
    %p23 = scmp.eq.s32.totalorder %s7, 1
    %p24 = por %p22, %p23
    %p25 = scmp.ne.s32.totalorder %s17, %s20
    %p26 = scmp.eq.s32.totalorder %s7, 0
    %p27 = por %p25, %p26
    %p28 = scmp.ne.s32.totalorder %s17, %s20
    %p29 = scmp.eq.s32.totalorder %s12, 1
    %p30 = por %p28, %p29
    %p31 = scmp.ne.s32.totalorder %s20, %s21
    %p32 = scmp.eq.s32.totalorder %s12, 0
    %p33 = por %p31, %p32
    %p34 = scmp.ne.s32.totalorder %s20, %s21
    %p35 = scmp.eq.s32.totalorder %s13, 1
    %p36 = por %p34, %p35
    %p38 = scmp.ne.s32.totalorder %s21, %s37
    %p39 = scmp.eq.s32.totalorder %s13, 0
    %p40 = por %p38, %p39
    %s41 = ssub.s32 %s7, %s14
    %p42 = scmp.eq.s32.totalorder %s41, 0
    %s44 = sadd.s32 %s43, 1
    %s45 = scalar_select %p42, %s43, %s44
    %p48 = pneg %p42
    %p49 = scmp.eq.s32.totalorder %s7, 1
    %p50 = por %p48, %p49
    %p51 = scmp.ne.s32.totalorder %s43, %s46
    %p52 = scmp.eq.s32.totalorder %s7, 0
    %p53 = por %p51, %p52
    %p54 = scmp.ne.s32.totalorder %s43, %s46
    %p55 = scmp.eq.s32.totalorder %s12, 1
    %p56 = por %p54, %p55
    %p57 = scmp.ne.s32.totalorder %s46, %s47
    %p58 = scmp.eq.s32.totalorder %s12, 0
    %p59 = por %p57, %p58
    %p60 = scmp.ne.s32.totalorder %s46, %s47
    %p61 = scmp.eq.s32.totalorder %s13, 1
    %p62 = por %p60, %p61
    %p64 = scmp.ne.s32.totalorder %s47, %s63
    %p65 = scmp.eq.s32.totalorder %s13, 0
    %p66 = por %p64, %p65
    %p67 = scmp.le.s32.totalorder 1, %s7
    %p68 = scmp.lt.s32.totalorder %s7, 3
    %p69 = pnand %p67, %p68
    %p70 = pneg %p69
    // Predicated region
    $region9: #{transformer_forward.12} parent=5 // pred_check
      _
    $region10: #{transformer_forward.12} parent=5 // pred_check_branch
      %72 = sbr.rel (%p69) target = $region12
    $region11: #{transformer_forward.12} parent=5 // pred_region
      %s73 = ssub.s32 %s7, 1
    $region12: #{transformer_forward.12} parent=5 // pred_fallthru
      _
    %p74 = scmp.lt.s32.totalorder %s7, 2
    // Predicated region
    $region13: #{transformer_forward.12} parent=5 // pred_check
      %p75 = pneg %p74
    $region14: #{transformer_forward.12} parent=5 // pred_check_branch
      %77 = sbr.rel (%p75) target = $region16
    $region15: #{transformer_forward.12} parent=5 // pred_region
      // Predicated region
      $region17: #{transformer_forward.12} parent=15 // pred_check
        %p78 = pneg %p27
      $region18: #{transformer_forward.12} parent=15 // pred_check_branch
        %80 = sbr.rel (%p78) target = $region20
      $region19: #{transformer_forward.12} parent=15 // pred_region
        %p81 = scmp.lt.s32.totalorder %s7, 1
        %s82 = scalar_select %p81, %s7, 1
        %s83 = smul.addr %s82, 8
        %s84 = scalar_lea.vmem %s0, %s83
      $region20: #{transformer_forward.12} parent=15 // pred_fallthru
        _
    $region16: #{transformer_forward.12} parent=5 // pred_fallthru
      _
    %p85 = scmp.le.s32.totalorder 1, %s7
    %p86 = scmp.lt.s32.totalorder %s7, 3
    %p87 = pnand %p85, %p86
    %p88 = pneg %p87
    // Predicated region
    $region21: #{transformer_forward.12} parent=5 // pred_check
      _
    $region22: #{transformer_forward.12} parent=5 // pred_check_branch
      %90 = sbr.rel (%p87) target = $region24
    $region23: #{transformer_forward.12} parent=5 // pred_region
      %s91 = ssub.s32 %s7, 1
      %p92 = scmp.lt.s32.totalorder %s12, 1
      %s93 = scalar_select %p92, %s12, 1
      %s94 = smul.addr %s93, 8
      %s95 = scalar_lea.vmem %s0, %s94
      %p96 = pneg %p33
      %p97 = pneg %p30
      %p98 = pneg %p59
      %p99 = pneg %p56
      %p100 = scmp.lt.s32.totalorder %s12, 1
      %s101 = scalar_select %p100, %s12, 1
      %s102 = smul.addr %s101, 8
      %s103 = scalar_lea.vmem %s1, %s102
      %p104 = scmp.lt.s32.totalorder %s12, 1
      %s105 = scalar_select %p104, %s12, 1
      %s106 = smul.addr %s105, 8
      %s107 = scalar_lea.vmem %s0, %s106
      %p108 = scmp.lt.s32.totalorder %s12, 1
      %s109 = scalar_select %p108, %s12, 1
      %s110 = smul.addr %s109, 8
      %s111 = scalar_lea.vmem %s1, %s110
      %v113 = vld [vmem:[%s107] sm:$0xff]
      %v114 = vmul.f32 %v113, 0.25
      %v115 = vpack.c.bf16 %v114, %v114
      %v116 = vpack.c.bf16 %v113, %v113
      %118 = vrot.lane.b32.xlu0 %v116, 96
      %v119 = vpop.permute.xlu0 %118
      %vm120 = vcmask 130048
      %v122 = vsel %vm120, %v115, 0
      %v125 = vsel %vm120, %v119, 0
      %127 = vmatprep.subr.bf16.mxu0 0
      %128 = vmatpush1.bf16.xpose.msra.mxu0 0
      %129 = vmatprep.subr.bf16.mxu0 0
      %130 = vmatpush1.bf16.xpose.msra.mxu0 0
      %131 = vmatprep.subr.bf16.mxu0 0
      %132 = vmatpush1.bf16.xpose.msra.mxu0 0
      %133 = vmatprep.subr.bf16.mxu0 0
      %134 = vmatpush1.bf16.xpose.msra.mxu0 0
      %135 = vmatprep.subr.bf16.mxu0 0
      %136 = vmatpush1.bf16.xpose.msra.mxu0 0
      %137 = vmatprep.subr.bf16.mxu0 0
      %138 = vmatpush1.bf16.xpose.msra.mxu0 0
      %139 = vmatprep.subr.bf16.mxu0 0
      %140 = vmatpush1.bf16.xpose.msra.mxu0 0
      %141 = vmatprep.subr.bf16.mxu0 0
      %142 = vmatpush1.bf16.xpose.msra.mxu0 %v125
      %143 = vmatprep.subr.bf16.mxu0 0
      %144 = vmatpush2.bf16.xpose.msra.mxu0 0
      %145 = vmatprep.subr.bf16.mxu0 0
      %146 = vmatpush2.bf16.xpose.msra.mxu0 0
      %147 = vmatprep.subr.bf16.mxu0 0
      %148 = vmatpush2.bf16.xpose.msra.mxu0 0
      %149 = vmatprep.subr.bf16.mxu0 0
      %150 = vmatpush2.bf16.xpose.msra.mxu0 0
      %151 = vmatprep.subr.bf16.mxu0 0
      %152 = vmatpush2.bf16.xpose.msra.mxu0 0
      %153 = vmatprep.subr.bf16.mxu0 0
      %154 = vmatpush2.bf16.xpose.msra.mxu0 0
      %155 = vmatprep.subr.bf16.mxu0 0
      %156 = vmatpush2.bf16.xpose.msra.mxu0 0
      %157 = vmatprep.subr.bf16.mxu0 0
      %158 = vmatpush2.bf16.xpose.msra.mxu0 0
      %159 = vmatprep.mubr.bf16.mxu0 0
      %160 = vmatmul.mubr.bf16.gmra.mxu0 %v122
      %v161 = vpop.f32.mrf.mxu0
      %v162 = vadd.f32 0.0, %v161
      %v163 = vpop.f32.mrf.mxu0
      %v164 = vpop.f32.mrf.mxu0
      %v165 = vpop.f32.mrf.mxu0
      %166 = vdwg.mxu0
      %vm167 = vcmask 64512
      %v168 = vsel %vm167, %v162, -inf
      %169 = vmax.xlane.f32.xlu0 %v168
      %v170 = vpop.xlane.xlu0 %169
      %v171 = vsub.f32 %v162, %v170
      %v172 = vmul.f32 %v171, 1.442695
      %v173 = vpow.pop %v172
      %v174 = vsel %vm167, %v173, 0.0
      %175 = vadd.xlane.f32.xlu0 %v174
      %v176 = vpop.xlane.xlu0 %175
      %v177 = vrcp.pop %v176
      %v178 = vmul.f32 %v173, %v177
      %v179 = vpack.c.bf16 %v178, %v178
      %180 = vrot.lane.b32.xlu0 %v116, 64
      %v181 = vpop.permute.xlu0 %180
      %v183 = vsel %vm167, %v179, 0
      %vm185 = vcmask 1043456
      %v187 = vsel %vm185, %v181, 0
      %189 = vmatprep.subr.bf16.mxu0 0
      %190 = vmatpush1.bf16.msra.mxu0 0
      %191 = vmatprep.subr.bf16.mxu0 0
      %192 = vmatpush1.bf16.msra.mxu0 0
      %193 = vmatprep.subr.bf16.mxu0 0
      %194 = vmatpush1.bf16.msra.mxu0 0
      %195 = vmatprep.subr.bf16.mxu0 0
      %196 = vmatpush1.bf16.msra.mxu0 0
      %197 = vmatprep.subr.bf16.mxu0 0
      %198 = vmatpush1.bf16.msra.mxu0 0
      %199 = vmatprep.subr.bf16.mxu0 0
      %200 = vmatpush1.bf16.msra.mxu0 0
      %201 = vmatprep.subr.bf16.mxu0 0
      %202 = vmatpush1.bf16.msra.mxu0 0
      %203 = vmatprep.subr.bf16.mxu0 0
      %204 = vmatpush1.bf16.msra.mxu0 %v187
      %205 = vmatprep.subr.bf16.mxu0 0
      %206 = vmatpush2.bf16.msra.mxu0 0
      %207 = vmatprep.subr.bf16.mxu0 0
      %208 = vmatpush2.bf16.msra.mxu0 0
      %209 = vmatprep.subr.bf16.mxu0 0
      %210 = vmatpush2.bf16.msra.mxu0 0
      %211 = vmatprep.subr.bf16.mxu0 0
      %212 = vmatpush2.bf16.msra.mxu0 0
      %213 = vmatprep.subr.bf16.mxu0 0
      %214 = vmatpush2.bf16.msra.mxu0 0
      %215 = vmatprep.subr.bf16.mxu0 0
      %216 = vmatpush2.bf16.msra.mxu0 0
      %217 = vmatprep.subr.bf16.mxu0 0
      %218 = vmatpush2.bf16.msra.mxu0 0
      %219 = vmatprep.subr.bf16.mxu0 0
      %220 = vmatpush2.bf16.msra.mxu0 0
      %221 = vmatprep.mubr.bf16.mxu0 0
      %222 = vmatmul.mubr.bf16.gmra.mxu0 %v183
      %v223 = vpop.f32.mrf.mxu0
      %v224 = vadd.f32 0.0, %v223
      %v225 = vpop.f32.mrf.mxu0
      %v226 = vpop.f32.mrf.mxu0
      %v227 = vpop.f32.mrf.mxu0
      %228 = vdwg.mxu0
      %229 = vst.msk [vmem:[%s111] sm:$0xff] %vm120, %v224
      %231 = vrot.lane.b32.xlu0 %v115, 112
      %v232 = vpop.permute.xlu0 %231
      %233 = vrot.lane.b32.xlu0 %v116, 80
      %v234 = vpop.permute.xlu0 %233
      %v236 = vsel %vm120, %v232, 0
      %v239 = vsel %vm120, %v234, 0
      %241 = vmatprep.subr.bf16.mxu0 0
      %242 = vmatpush1.bf16.xpose.msra.mxu0 0
      %243 = vmatprep.subr.bf16.mxu0 0
      %244 = vmatpush1.bf16.xpose.msra.mxu0 0
      %245 = vmatprep.subr.bf16.mxu0 0
      %246 = vmatpush1.bf16.xpose.msra.mxu0 0
      %247 = vmatprep.subr.bf16.mxu0 0
      %248 = vmatpush1.bf16.xpose.msra.mxu0 0
      %249 = vmatprep.subr.bf16.mxu0 0
      %250 = vmatpush1.bf16.xpose.msra.mxu0 0
      %251 = vmatprep.subr.bf16.mxu0 0
      %252 = vmatpush1.bf16.xpose.msra.mxu0 0
      %253 = vmatprep.subr.bf16.mxu0 0
      %254 = vmatpush1.bf16.xpose.msra.mxu0 0
      %255 = vmatprep.subr.bf16.mxu0 0
      %256 = vmatpush1.bf16.xpose.msra.mxu0 %v239
      %257 = vmatprep.subr.bf16.mxu0 0
      %258 = vmatpush2.bf16.xpose.msra.mxu0 0
      %259 = vmatprep.subr.bf16.mxu0 0
      %260 = vmatpush2.bf16.xpose.msra.mxu0 0
      %261 = vmatprep.subr.bf16.mxu0 0
      %262 = vmatpush2.bf16.xpose.msra.mxu0 0
      %263 = vmatprep.subr.bf16.mxu0 0
      %264 = vmatpush2.bf16.xpose.msra.mxu0 0
      %265 = vmatprep.subr.bf16.mxu0 0
      %266 = vmatpush2.bf16.xpose.msra.mxu0 0
      %267 = vmatprep.subr.bf16.mxu0 0
      %268 = vmatpush2.bf16.xpose.msra.mxu0 0
      %269 = vmatprep.subr.bf16.mxu0 0
      %270 = vmatpush2.bf16.xpose.msra.mxu0 0
      %271 = vmatprep.subr.bf16.mxu0 0
      %272 = vmatpush2.bf16.xpose.msra.mxu0 0
      %273 = vmatprep.mubr.bf16.mxu0 0
      %274 = vmatmul.mubr.bf16.gmra.mxu0 %v236
      %v275 = vpop.f32.mrf.mxu0
      %v276 = vadd.f32 0.0, %v275
      %v277 = vpop.f32.mrf.mxu0
      %v278 = vpop.f32.mrf.mxu0
      %v279 = vpop.f32.mrf.mxu0
      %280 = vdwg.mxu0
      %v281 = vsel %vm167, %v276, -inf
      %282 = vmax.xlane.f32.xlu0 %v281
      %v283 = vpop.xlane.xlu0 %282
      %v284 = vsub.f32 %v276, %v283
      %v285 = vmul.f32 %v284, 1.442695
      %v286 = vpow.pop %v285
      %v287 = vsel %vm167, %v286, 0.0
      %288 = vadd.xlane.f32.xlu0 %v287
      %v289 = vpop.xlane.xlu0 %288
      %v290 = vrcp.pop %v289
      %v291 = vmul.f32 %v286, %v290
      %v292 = vpack.c.bf16 %v291, %v291
      %293 = vrot.lane.b32.xlu0 %v116, 48
      %v294 = vpop.permute.xlu0 %293
      %v296 = vsel %vm167, %v292, 0
      %v299 = vsel %vm185, %v294, 0
      %301 = vmatprep.subr.bf16.mxu0 0
      %302 = vmatpush1.bf16.msra.mxu0 0
      %303 = vmatprep.subr.bf16.mxu0 0
      %304 = vmatpush1.bf16.msra.mxu0 0
      %305 = vmatprep.subr.bf16.mxu0 0
      %306 = vmatpush1.bf16.msra.mxu0 0
      %307 = vmatprep.subr.bf16.mxu0 0
      %308 = vmatpush1.bf16.msra.mxu0 0
      %309 = vmatprep.subr.bf16.mxu0 0
      %310 = vmatpush1.bf16.msra.mxu0 0
      %311 = vmatprep.subr.bf16.mxu0 0
      %312 = vmatpush1.bf16.msra.mxu0 0
      %313 = vmatprep.subr.bf16.mxu0 0
      %314 = vmatpush1.bf16.msra.mxu0 0
      %315 = vmatprep.subr.bf16.mxu0 0
      %316 = vmatpush1.bf16.msra.mxu0 %v299
      %317 = vmatprep.subr.bf16.mxu0 0
      %318 = vmatpush2.bf16.msra.mxu0 0
      %319 = vmatprep.subr.bf16.mxu0 0
      %320 = vmatpush2.bf16.msra.mxu0 0
      %321 = vmatprep.subr.bf16.mxu0 0
      %322 = vmatpush2.bf16.msra.mxu0 0
      %323 = vmatprep.subr.bf16.mxu0 0
      %324 = vmatpush2.bf16.msra.mxu0 0
      %325 = vmatprep.subr.bf16.mxu0 0
      %326 = vmatpush2.bf16.msra.mxu0 0
      %327 = vmatprep.subr.bf16.mxu0 0
      %328 = vmatpush2.bf16.msra.mxu0 0
      %329 = vmatprep.subr.bf16.mxu0 0
      %330 = vmatpush2.bf16.msra.mxu0 0
      %331 = vmatprep.subr.bf16.mxu0 0
      %332 = vmatpush2.bf16.msra.mxu0 0
      %333 = vmatprep.mubr.bf16.mxu0 0
      %334 = vmatmul.mubr.bf16.gmra.mxu0 %v296
      %v335 = vpop.f32.mrf.mxu0
      %v336 = vadd.f32 0.0, %v335
      %v337 = vpop.f32.mrf.mxu0
      %v338 = vpop.f32.mrf.mxu0
      %v339 = vpop.f32.mrf.mxu0
      %340 = vdwg.mxu0
      %342 = vrot.lane.b32.xlu0 %v336, 16
      %v343 = vpop.permute.xlu0 %342
      %vm345 = vcmask 261248
      %346 = vst.msk [vmem:[%s111] sm:$0xff] %vm345, %v343
      %p347 = scmp.lt.s32.totalorder %s12, 1
      %s348 = scalar_select %p347, %s12, 1
      %s349 = smul.addr %s348, 8
      %s350 = scalar_lea.vmem %s1, %s349
      // Predicated region
      $region25: #{transformer_forward.12} parent=23 // pred_check
        %p351 = pneg %p56
      $region26: #{transformer_forward.12} parent=23 // pred_check_branch
        %353 = sbr.rel (%p351) target = $region28
      $region27: #{transformer_forward.12} parent=23 // pred_region
        _
      $region28: #{transformer_forward.12} parent=23 // pred_fallthru
        _
    $region24: #{transformer_forward.12} parent=5 // pred_fallthru
      _
    %p354 = scmp.le.s32.totalorder 2, %s7
    // Predicated region
    $region29: #{transformer_forward.12} parent=5 // pred_check
      %p355 = pneg %p354
    $region30: #{transformer_forward.12} parent=5 // pred_check_branch
      %357 = sbr.rel (%p355) target = $region32
    $region31: #{transformer_forward.12} parent=5 // pred_region
      %s358 = ssub.s32 %s7, 2
      // Predicated region
      $region33: #{transformer_forward.12} parent=31 // pred_check
        %p359 = pneg %p62
      $region34: #{transformer_forward.12} parent=31 // pred_check_branch
        %361 = sbr.rel (%p359) target = $region36
      $region35: #{transformer_forward.12} parent=31 // pred_region
        %p362 = scmp.lt.s32.totalorder %s13, 1
        %s363 = scalar_select %p362, %s13, 1
        %s364 = smul.addr %s363, 8
        %s365 = scalar_lea.vmem %s1, %s364
      $region36: #{transformer_forward.12} parent=31 // pred_fallthru
        _
    $region32: #{transformer_forward.12} parent=5 // pred_fallthru
      _
  $region6: #{transformer_forward.12} parent=0 // loop_footer
    %s11 = sadd.s32 1, %s7
  $region7: #{transformer_forward.12} parent=0 // loop_footer_branch
    %6 = sbr.rel target = $region3
  $region8: #{transformer_forward.12} parent=0 // loop_exit
    _

// kernel: transformer_forward.13
$region0: #{transformer_forward.13}
  #allocation0 [shape = 'u32[]', space=smem, size = 0x4, offset = 0x4, fixed_abs, tag = 'smem constant byte address 0x4 - core index']
  #allocation1 [shape = 'u32[144,128]{1,0:T(1,128)}', space=vmem, size = 0x12000, scoped, tag = 'internal scratch']
  %s0 = inlined_call_operand.vmem [shape: f32[16,32], index: 0, kind: input, shape index: {}]
  %s1 = inlined_call_operand.vmem [shape: f32[16,32], index: 1, kind: input, shape index: {}]
  %s2 = inlined_call_operand.vmem [shape: f32[32,32], index: 2, kind: input, shape index: {}]
  %s3 = inlined_call_operand.vmem [shape: f32[1,32], index: 3, kind: input, shape index: {}]
  %s4 = inlined_call_operand.vmem [shape: f32[1,32], index: 4, kind: input, shape index: {}]
  %s5 = inlined_call_operand.vmem [shape: f32[1,32], index: 5, kind: input, shape index: {}]
  %s6 = inlined_call_operand.vmem [shape: f32[16,32], index: 6, kind: output, shape index: {}]
  %s7 = sld [smem:[#allocation0]]
  $region34: #{transformer_forward.13} parent=0
    _
  %s9 = ssub.s32 1, %s7
  %s10 = scalar_select 0, %s9, %s7
  // Predicated region
  $region2: #{transformer_forward.13} parent=0 // pred_check
    _
  $region3: #{transformer_forward.13} parent=0 // pred_check_branch
    %12 = sbr.rel (0) target = $region5
  $region4: #{transformer_forward.13} parent=0 // pred_region
    _
  $region5: #{transformer_forward.13} parent=0 // pred_fallthru
    _
  // Predicated region
  $region6: #{transformer_forward.13} parent=0 // pred_check
    _
  $region7: #{transformer_forward.13} parent=0 // pred_check_branch
    %14 = sbr.rel (0) target = $region9
  $region8: #{transformer_forward.13} parent=0 // pred_region
    _
  $region9: #{transformer_forward.13} parent=0 // pred_fallthru
    _
  // Predicated region
  $region10: #{transformer_forward.13} parent=0 // pred_check
    _
  $region11: #{transformer_forward.13} parent=0 // pred_check_branch
    %16 = sbr.rel (0) target = $region13
  $region12: #{transformer_forward.13} parent=0 // pred_region
    _
  $region13: #{transformer_forward.13} parent=0 // pred_fallthru
    _
  // Predicated region
  $region14: #{transformer_forward.13} parent=0 // pred_check
    _
  $region15: #{transformer_forward.13} parent=0 // pred_check_branch
    %18 = sbr.rel (0) target = $region17
  $region16: #{transformer_forward.13} parent=0 // pred_region
    _
  $region17: #{transformer_forward.13} parent=0 // pred_fallthru
    _
  // Predicated region
  $region18: #{transformer_forward.13} parent=0 // pred_check
    _
  $region19: #{transformer_forward.13} parent=0 // pred_check_branch
    %20 = sbr.rel (0) target = $region21
  $region20: #{transformer_forward.13} parent=0 // pred_region
    _
  $region21: #{transformer_forward.13} parent=0 // pred_fallthru
    _
  // Predicated region
  $region22: #{transformer_forward.13} parent=0 // pred_check
    _
  $region23: #{transformer_forward.13} parent=0 // pred_check_branch
    %22 = sbr.rel (0) target = $region25
  $region24: #{transformer_forward.13} parent=0 // pred_region
    _
  $region25: #{transformer_forward.13} parent=0 // pred_fallthru
    _
  %v24 = vld [vmem:[%s1] sm:$0xff]
  %v25 = vld [vmem:[%s1 + $0x8] sm:$0xff]
  %v26 = vpack.c.bf16 %v25, %v24
  %v27 = vld [vmem:[%s2] sm:$0xff]
  %v28 = vld [vmem:[%s2 + $0x8] sm:$0xff]
  %v29 = vld [vmem:[%s2 + $0x10] sm:$0xff]
  %v30 = vld [vmem:[%s2 + $0x18] sm:$0xff]
  %v31 = vpack.c.bf16 %v28, %v27
  %v32 = vpack.c.bf16 %v30, %v29
  %v33 = vld [vmem:[%s3] sm:$0x1]
  %v35 = vlaneseq
  %v36 = vshrl.u32 %v35, 7
  %v37 = vsub.s32 0, %v36
  %v38 = vrot.slane %v33, %v37
  %vm40 = vcmask 261120
  %v42 = vsel %vm40, %v26, 0
  %44 = vmatprep.subr.bf16.mxu0 0
  %45 = vmatpush1.bf16.msra.mxu0 0
  %46 = vmatprep.subr.bf16.mxu0 0
  %47 = vmatpush1.bf16.msra.mxu0 0
  %48 = vmatprep.subr.bf16.mxu0 0
  %49 = vmatpush1.bf16.msra.mxu0 0
  %50 = vmatprep.subr.bf16.mxu0 0
  %51 = vmatpush1.bf16.msra.mxu0 0
  %52 = vmatprep.subr.bf16.mxu0 0
  %53 = vmatpush1.bf16.msra.mxu0 0
  %54 = vmatprep.subr.bf16.mxu0 0
  %55 = vmatpush1.bf16.msra.mxu0 0
  %56 = vmatprep.subr.bf16.mxu0 0
  %57 = vmatpush1.bf16.msra.mxu0 %v32
  %58 = vmatprep.subr.bf16.mxu0 0
  %59 = vmatpush1.bf16.msra.mxu0 %v31
  %60 = vmatprep.subr.bf16.mxu0 0
  %61 = vmatpush2.bf16.msra.mxu0 0
  %62 = vmatprep.subr.bf16.mxu0 0
  %63 = vmatpush2.bf16.msra.mxu0 0
  %64 = vmatprep.subr.bf16.mxu0 0
  %65 = vmatpush2.bf16.msra.mxu0 0
  %66 = vmatprep.subr.bf16.mxu0 0
  %67 = vmatpush2.bf16.msra.mxu0 0
  %68 = vmatprep.subr.bf16.mxu0 0
  %69 = vmatpush2.bf16.msra.mxu0 0
  %70 = vmatprep.subr.bf16.mxu0 0
  %71 = vmatpush2.bf16.msra.mxu0 0
  %72 = vmatprep.subr.bf16.mxu0 0
  %73 = vmatpush2.bf16.msra.mxu0 0
  %74 = vmatprep.subr.bf16.mxu0 0
  %75 = vmatpush2.bf16.msra.mxu0 0
  %76 = vmatprep.mubr.bf16.mxu0 0
  %77 = vmatmul.mubr.bf16.gmra.mxu0 %v42
  %v78 = vpop.f32.mrf.mxu0
  %v79 = vadd.f32 %v38, %v78
  %v80 = vpop.f32.mrf.mxu0
  %v81 = vpop.f32.mrf.mxu0
  %v82 = vadd.f32 %v38, %v81
  %v83 = vpop.f32.mrf.mxu0
  %84 = vdwg.mxu0
  %v85 = vld [vmem:[%s0] sm:$0xff]
  %v86 = vld [vmem:[%s0 + $0x8] sm:$0xff]
  %v87 = vadd.f32 %v85, %v79
  %v88 = vadd.f32 %v86, %v82
  %v89 = vsel %vm40, %v87, 0.0
  %90 = vadd.xlane.f32.xlu0 %v89
  %v91 = vpop.xlane.xlu0 %90
  %v92 = vsel %vm40, %v88, 0.0
  %93 = vadd.xlane.f32.xlu0 %v92
  %v94 = vpop.xlane.xlu0 %93
  %v95 = vrcp.pop 32.0
  %v96 = vmul.f32 %v91, %v95
  %v97 = vmul.f32 %v94, %v95
  %v98 = vsub.f32 %v87, %v96
  %v99 = vsub.f32 %v88, %v97
  %v100 = vmul.f32 %v98, %v98
  %v101 = vmul.f32 %v99, %v99
  %v102 = vsel %vm40, %v100, 0.0
  %103 = vadd.xlane.f32.xlu0 %v102
  %v104 = vpop.xlane.xlu0 %103
  %v105 = vsel %vm40, %v101, 0.0
  %106 = vadd.xlane.f32.xlu0 %v105
  %v107 = vpop.xlane.xlu0 %106
  %v108 = vmul.f32 %v104, %v95
  %v109 = vmul.f32 %v107, %v95
  %v110 = vadd.f32 %v108, 1e-05
  %v111 = vadd.f32 %v109, 1e-05
  %v112 = vrsqrt.pop %v110
  %v113 = vrsqrt.pop %v111
  %v114 = vmul.f32 %v98, %v112
  %v115 = vmul.f32 %v99, %v113
  %v116 = vld [vmem:[%s4] sm:$0x1]
  %v118 = vlaneseq
  %v119 = vshrl.u32 %v118, 7
  %v120 = vsub.s32 0, %v119
  %v121 = vrot.slane %v116, %v120
  %v123 = vmul.f32 %v114, %v121
  %v124 = vmul.f32 %v115, %v121
  %v125 = vld [vmem:[%s5] sm:$0x1]
  %v127 = vlaneseq
  %v128 = vshrl.u32 %v127, 7
  %v129 = vsub.s32 0, %v128
  %v130 = vrot.slane %v125, %v129
  %v132 = vadd.f32 %v123, %v130
  %v133 = vadd.f32 %v124, %v130
  %134 = vst.msk [vmem:[%s6] sm:$0xff] %vm40, %v132
  %135 = vst.msk [vmem:[%s6 + $0x8] sm:$0xff] %vm40, %v133
  // Predicated region
  $region26: #{transformer_forward.13} parent=0 // pred_check
    _
  $region27: #{transformer_forward.13} parent=0 // pred_check_branch
    %137 = sbr.rel (0) target = $region29
  $region28: #{transformer_forward.13} parent=0 // pred_region
    _
  $region29: #{transformer_forward.13} parent=0 // pred_fallthru
    _
  // Predicated region
  $region30: #{transformer_forward.13} parent=0 // pred_check
    _
  $region31: #{transformer_forward.13} parent=0 // pred_check_branch
    %139 = sbr.rel (0) target = $region33
  $region32: #{transformer_forward.13} parent=0 // pred_region
    _
  $region33: #{transformer_forward.13} parent=0 // pred_fallthru
    _

// kernel: transformer_forward.14
$region0: #{transformer_forward.14}
  #allocation0 [shape = 'u32[]', space=smem, size = 0x4, offset = 0x4, fixed_abs, tag = 'smem constant byte address 0x4 - core index']
  #allocation1 [shape = 'u32[144,128]{1,0:T(1,128)}', space=vmem, size = 0x12000, scoped, tag = 'internal scratch']
  #allocation2 [shape = 'f32[16,32]{1,0:T(8,128)}', space=vmem, size = 0x2000, scoped, tag = 'scratch operand']
  %s0 = inlined_call_operand.vmem [shape: f32[16,32], index: 0, kind: input, shape index: {}]
  %s1 = inlined_call_operand.vmem [shape: f32[32,64], index: 1, kind: input, shape index: {}]
  %s2 = inlined_call_operand.vmem [shape: f32[1,64], index: 2, kind: input, shape index: {}]
  %s3 = inlined_call_operand.vmem [shape: f32[64,32], index: 3, kind: input, shape index: {}]
  %s4 = inlined_call_operand.vmem [shape: f32[1,32], index: 4, kind: input, shape index: {}]
  %s5 = inlined_call_operand.vmem [shape: f32[1,32], index: 5, kind: input, shape index: {}]
  %s6 = inlined_call_operand.vmem [shape: f32[1,32], index: 6, kind: input, shape index: {}]
  %s7 = inlined_call_operand.vmem [shape: f32[16,32], index: 7, kind: output, shape index: {}]
  %s8 = sld [smem:[#allocation0]]
  $region46: #{transformer_forward.14} parent=0
    _
  %s10 = ssub.s32 1, %s8
  %s11 = scalar_select 0, %s10, %s8
  // Predicated region
  $region2: #{transformer_forward.14} parent=0 // pred_check
    _
  $region3: #{transformer_forward.14} parent=0 // pred_check_branch
    %13 = sbr.rel (0) target = $region5
  $region4: #{transformer_forward.14} parent=0 // pred_region
    _
  $region5: #{transformer_forward.14} parent=0 // pred_fallthru
    _
  // Predicated region
  $region6: #{transformer_forward.14} parent=0 // pred_check
    _
  $region7: #{transformer_forward.14} parent=0 // pred_check_branch
    %15 = sbr.rel (0) target = $region9
  $region8: #{transformer_forward.14} parent=0 // pred_region
    _
  $region9: #{transformer_forward.14} parent=0 // pred_fallthru
    _
  // Predicated region
  $region10: #{transformer_forward.14} parent=0 // pred_check
    _
  $region11: #{transformer_forward.14} parent=0 // pred_check_branch
    %17 = sbr.rel (0) target = $region13
  $region12: #{transformer_forward.14} parent=0 // pred_region
    _
  $region13: #{transformer_forward.14} parent=0 // pred_fallthru
    _
  // Predicated region
  $region14: #{transformer_forward.14} parent=0 // pred_check
    _
  $region15: #{transformer_forward.14} parent=0 // pred_check_branch
    %19 = sbr.rel (0) target = $region17
  $region16: #{transformer_forward.14} parent=0 // pred_region
    _
  $region17: #{transformer_forward.14} parent=0 // pred_fallthru
    _
  // Predicated region
  $region18: #{transformer_forward.14} parent=0 // pred_check
    _
  $region19: #{transformer_forward.14} parent=0 // pred_check_branch
    %21 = sbr.rel (0) target = $region21
  $region20: #{transformer_forward.14} parent=0 // pred_region
    _
  $region21: #{transformer_forward.14} parent=0 // pred_fallthru
    _
  // Predicated region
  $region22: #{transformer_forward.14} parent=0 // pred_check
    _
  $region23: #{transformer_forward.14} parent=0 // pred_check_branch
    %23 = sbr.rel (0) target = $region25
  $region24: #{transformer_forward.14} parent=0 // pred_region
    _
  $region25: #{transformer_forward.14} parent=0 // pred_fallthru
    _
  // Predicated region
  $region26: #{transformer_forward.14} parent=0 // pred_check
    _
  $region27: #{transformer_forward.14} parent=0 // pred_check_branch
    %25 = sbr.rel (0) target = $region29
  $region28: #{transformer_forward.14} parent=0 // pred_region
    _
  $region29: #{transformer_forward.14} parent=0 // pred_fallthru
    _
  %p27 = scmp.eq.s32.totalorder 0, 0
  // Predicated region
  $region30: #{transformer_forward.14} parent=0 // pred_check
    %p28 = pneg %p27
  $region31: #{transformer_forward.14} parent=0 // pred_check_branch
    %30 = sbr.rel (%p28) target = $region33
  $region32: #{transformer_forward.14} parent=0 // pred_region
    %vm31 = vcmask 261120
    %32 = vst.msk [vmem:[#allocation2] sm:$0xff] %vm31, 0.0
    %33 = vst.msk [vmem:[#allocation2 + $0x8] sm:$0xff] %vm31, 0.0
  $region33: #{transformer_forward.14} parent=0 // pred_fallthru
    _
  %v34 = vld [vmem:[%s0] sm:$0xff]
  %v35 = vld [vmem:[%s0 + $0x8] sm:$0xff]
  %v36 = vpack.c.bf16 %v35, %v34
  %v37 = vld [vmem:[%s1] sm:$0xff]
  %v38 = vld [vmem:[%s1 + $0x8] sm:$0xff]
  %v39 = vld [vmem:[%s1 + $0x10] sm:$0xff]
  %v40 = vld [vmem:[%s1 + $0x18] sm:$0xff]
  %v41 = vpack.c.bf16 %v38, %v37
  %v42 = vpack.c.bf16 %v40, %v39
  %v43 = vld [vmem:[%s2] sm:$0x1]
  %v45 = vlaneseq
  %v46 = vshrl.u32 %v45, 7
  %v47 = vsub.s32 0, %v46
  %v48 = vrot.slane %v43, %v47
  %vm50 = vcmask 261120
  %v52 = vsel %vm50, %v36, 0
  %54 = vmatprep.subr.bf16.mxu0 0
  %55 = vmatpush1.bf16.msra.mxu0 0
  %56 = vmatprep.subr.bf16.mxu0 0
  %57 = vmatpush1.bf16.msra.mxu0 0
  %58 = vmatprep.subr.bf16.mxu0 0
  %59 = vmatpush1.bf16.msra.mxu0 0
  %60 = vmatprep.subr.bf16.mxu0 0
  %61 = vmatpush1.bf16.msra.mxu0 0
  %62 = vmatprep.subr.bf16.mxu0 0
  %63 = vmatpush1.bf16.msra.mxu0 0
  %64 = vmatprep.subr.bf16.mxu0 0
  %65 = vmatpush1.bf16.msra.mxu0 0
  %66 = vmatprep.subr.bf16.mxu0 0
  %67 = vmatpush1.bf16.msra.mxu0 %v42
  %68 = vmatprep.subr.bf16.mxu0 0
  %69 = vmatpush1.bf16.msra.mxu0 %v41
  %70 = vmatprep.subr.bf16.mxu0 0
  %71 = vmatpush2.bf16.msra.mxu0 0
  %72 = vmatprep.subr.bf16.mxu0 0
  %73 = vmatpush2.bf16.msra.mxu0 0
  %74 = vmatprep.subr.bf16.mxu0 0
  %75 = vmatpush2.bf16.msra.mxu0 0
  %76 = vmatprep.subr.bf16.mxu0 0
  %77 = vmatpush2.bf16.msra.mxu0 0
  %78 = vmatprep.subr.bf16.mxu0 0
  %79 = vmatpush2.bf16.msra.mxu0 0
  %80 = vmatprep.subr.bf16.mxu0 0
  %81 = vmatpush2.bf16.msra.mxu0 0
  %82 = vmatprep.subr.bf16.mxu0 0
  %83 = vmatpush2.bf16.msra.mxu0 0
  %84 = vmatprep.subr.bf16.mxu0 0
  %85 = vmatpush2.bf16.msra.mxu0 0
  %86 = vmatprep.mubr.bf16.mxu0 0
  %87 = vmatmul.mubr.bf16.gmra.mxu0 %v52
  %v88 = vpop.f32.mrf.mxu0
  %v89 = vadd.f32 %v48, %v88
  %v90 = vpop.f32.mrf.mxu0
  %v91 = vpop.f32.mrf.mxu0
  %v92 = vadd.f32 %v48, %v91
  %v93 = vpop.f32.mrf.mxu0
  %94 = vdwg.mxu0
  %v95 = vmax.f32 %v89, 0.0
  %v96 = vmax.f32 %v92, 0.0
  %v97 = vld [vmem:[#allocation2] sm:$0xff]
  %v98 = vld [vmem:[#allocation2 + $0x8] sm:$0xff]
  %v99 = vpack.c.bf16 %v96, %v95
  %v100 = vld [vmem:[%s3] sm:$0xff]
  %v101 = vld [vmem:[%s3 + $0x8] sm:$0xff]
  %v102 = vld [vmem:[%s3 + $0x10] sm:$0xff]
  %v103 = vld [vmem:[%s3 + $0x18] sm:$0xff]
  %v104 = vld [vmem:[%s3 + $0x20] sm:$0xff]
  %v105 = vld [vmem:[%s3 + $0x28] sm:$0xff]
  %v106 = vld [vmem:[%s3 + $0x30] sm:$0xff]
  %v107 = vld [vmem:[%s3 + $0x38] sm:$0xff]
  %v108 = vpack.c.bf16 %v101, %v100
  %v109 = vpack.c.bf16 %v103, %v102
  %v110 = vpack.c.bf16 %v105, %v104
  %v111 = vpack.c.bf16 %v107, %v106
  %vm112 = vcmask 523264
  %v114 = vsel %vm112, %v99, 0
  %116 = vmatprep.subr.bf16.mxu0 0
  %117 = vmatpush1.bf16.msra.mxu0 0
  %118 = vmatprep.subr.bf16.mxu0 0
  %119 = vmatpush1.bf16.msra.mxu0 0
  %120 = vmatprep.subr.bf16.mxu0 0
  %121 = vmatpush1.bf16.msra.mxu0 0
  %122 = vmatprep.subr.bf16.mxu0 0
  %123 = vmatpush1.bf16.msra.mxu0 0
  %124 = vmatprep.subr.bf16.mxu0 0
  %125 = vmatpush1.bf16.msra.mxu0 %v111
  %126 = vmatprep.subr.bf16.mxu0 0
  %127 = vmatpush1.bf16.msra.mxu0 %v110
  %128 = vmatprep.subr.bf16.mxu0 0
  %129 = vmatpush1.bf16.msra.mxu0 %v109
  %130 = vmatprep.subr.bf16.mxu0 0
  %131 = vmatpush1.bf16.msra.mxu0 %v108
  %132 = vmatprep.subr.bf16.mxu0 0
  %133 = vmatpush2.bf16.msra.mxu0 0
  %134 = vmatprep.subr.bf16.mxu0 0
  %135 = vmatpush2.bf16.msra.mxu0 0
  %136 = vmatprep.subr.bf16.mxu0 0
  %137 = vmatpush2.bf16.msra.mxu0 0
  %138 = vmatprep.subr.bf16.mxu0 0
  %139 = vmatpush2.bf16.msra.mxu0 0
  %140 = vmatprep.subr.bf16.mxu0 0
  %141 = vmatpush2.bf16.msra.mxu0 0
  %142 = vmatprep.subr.bf16.mxu0 0
  %143 = vmatpush2.bf16.msra.mxu0 0
  %144 = vmatprep.subr.bf16.mxu0 0
  %145 = vmatpush2.bf16.msra.mxu0 0
  %146 = vmatprep.subr.bf16.mxu0 0
  %147 = vmatpush2.bf16.msra.mxu0 0
  %148 = vmatprep.mubr.bf16.mxu0 0
  %149 = vmatmul.mubr.bf16.gmra.mxu0 %v114
  %v150 = vpop.f32.mrf.mxu0
  %v151 = vadd.f32 0.0, %v150
  %v152 = vpop.f32.mrf.mxu0
  %v153 = vpop.f32.mrf.mxu0
  %v154 = vadd.f32 0.0, %v153
  %v155 = vpop.f32.mrf.mxu0
  %156 = vdwg.mxu0
  %v157 = vadd.f32 %v97, %v151
  %v158 = vadd.f32 %v98, %v154
  %159 = vst.msk [vmem:[#allocation2] sm:$0xff] %vm50, %v157
  %160 = vst.msk [vmem:[#allocation2 + $0x8] sm:$0xff] %vm50, %v158
  // Predicated region
  $region34: #{transformer_forward.14} parent=0 // pred_check
    %p161 = pneg %p27
  $region35: #{transformer_forward.14} parent=0 // pred_check_branch
    %163 = sbr.rel (%p161) target = $region37
  $region36: #{transformer_forward.14} parent=0 // pred_region
    %v164 = vld [vmem:[#allocation2] sm:$0xff]
    %v165 = vld [vmem:[#allocation2 + $0x8] sm:$0xff]
    %v166 = vadd.f32 %v34, %v164
    %v167 = vadd.f32 %v35, %v165
    %v168 = vld [vmem:[%s4] sm:$0x1]
    %v170 = vlaneseq
    %v171 = vshrl.u32 %v170, 7
    %v172 = vsub.s32 0, %v171
    %v173 = vrot.slane %v168, %v172
    %v175 = vadd.f32 %v166, %v173
    %v176 = vadd.f32 %v167, %v173
    %v177 = vsel %vm50, %v175, 0.0
    %178 = vadd.xlane.f32.xlu0 %v177
    %v179 = vpop.xlane.xlu0 %178
    %v180 = vsel %vm50, %v176, 0.0
    %181 = vadd.xlane.f32.xlu0 %v180
    %v182 = vpop.xlane.xlu0 %181
    %v183 = vrcp.pop 32.0
    %v184 = vmul.f32 %v179, %v183
    %v185 = vmul.f32 %v182, %v183
    %v186 = vsub.f32 %v175, %v184
    %v187 = vsub.f32 %v176, %v185
    %v188 = vmul.f32 %v186, %v186
    %v189 = vmul.f32 %v187, %v187
    %v190 = vsel %vm50, %v188, 0.0
    %191 = vadd.xlane.f32.xlu0 %v190
    %v192 = vpop.xlane.xlu0 %191
    %v193 = vsel %vm50, %v189, 0.0
    %194 = vadd.xlane.f32.xlu0 %v193
    %v195 = vpop.xlane.xlu0 %194
    %v196 = vmul.f32 %v192, %v183
    %v197 = vmul.f32 %v195, %v183
    %v198 = vadd.f32 %v196, 1e-05
    %v199 = vadd.f32 %v197, 1e-05
    %v200 = vrsqrt.pop %v198
    %v201 = vrsqrt.pop %v199
    %v202 = vmul.f32 %v186, %v200
    %v203 = vmul.f32 %v187, %v201
    %v204 = vld [vmem:[%s5] sm:$0x1]
    %v206 = vlaneseq
    %v207 = vshrl.u32 %v206, 7
    %v208 = vsub.s32 0, %v207
    %v209 = vrot.slane %v204, %v208
    %v211 = vmul.f32 %v202, %v209
    %v212 = vmul.f32 %v203, %v209
    %v213 = vld [vmem:[%s6] sm:$0x1]
    %v215 = vlaneseq
    %v216 = vshrl.u32 %v215, 7
    %v217 = vsub.s32 0, %v216
    %v218 = vrot.slane %v213, %v217
    %v220 = vadd.f32 %v211, %v218
    %v221 = vadd.f32 %v212, %v218
    %222 = vst.msk [vmem:[%s7] sm:$0xff] %vm50, %v220
    %223 = vst.msk [vmem:[%s7 + $0x8] sm:$0xff] %vm50, %v221
  $region37: #{transformer_forward.14} parent=0 // pred_fallthru
    _
  // Predicated region
  $region38: #{transformer_forward.14} parent=0 // pred_check
    _
  $region39: #{transformer_forward.14} parent=0 // pred_check_branch
    %225 = sbr.rel (0) target = $region41
  $region40: #{transformer_forward.14} parent=0 // pred_region
    _
  $region41: #{transformer_forward.14} parent=0 // pred_fallthru
    _
  // Predicated region
  $region42: #{transformer_forward.14} parent=0 // pred_check
    _
  $region43: #{transformer_forward.14} parent=0 // pred_check_branch
    %227 = sbr.rel (0) target = $region45
  $region44: #{transformer_forward.14} parent=0 // pred_region
    _
  $region45: #{transformer_forward.14} parent=0 // pred_fallthru
    _

// kernel: transformer_forward.19
$region0: #{transformer_forward.19}
  #allocation0 [shape = 'u32[]', space=smem, size = 0x4, offset = 0x4, fixed_abs, tag = 'smem constant byte address 0x4 - core index']
  #allocation1 [shape = 'u32[144,128]{1,0:T(1,128)}', space=vmem, size = 0x12000, scoped, tag = 'internal scratch']
  #allocation2 [shape = 'f32[16,16]{1,0:T(8,128)}', space=vmem, size = 0x2000, scoped, tag = 'scratch operand']
  %s0 = inlined_call_operand.vmem [shape: f32[16,32], index: 0, kind: input, shape index: {}]
  %s1 = inlined_call_operand.vmem [shape: f32[32,16], index: 1, kind: input, shape index: {}]
  %s2 = inlined_call_operand.vmem [shape: f32[1,16], index: 2, kind: input, shape index: {}]
  %s3 = inlined_call_operand.hbm [shape: f32[16,16], index: 3, kind: output, shape index: {}]
  %s4 = sld [smem:[#allocation0]]
  $region30: #{transformer_forward.19} parent=0
    _
  %s6 = ssub.s32 1, %s4
  %s7 = scalar_select 0, %s6, %s4
  $region1: #{transformer_forward.19} parent=0
    #allocation3 [shape = 'u8[8192]{0}', space=vmem, size = 0x2000, scoped, tag = 'output window, operand 0, single buffered']
    #allocation4 [shape = 's32[1]{0}', space=sflag, size = 0x4, scoped, tag = 'scoped memory for transformer_forward.19']
    %8 = vsyncpa [#allocation4], 0
    // Predicated region
    $region2: #{transformer_forward.19} parent=1 // pred_check
      _
    $region3: #{transformer_forward.19} parent=1 // pred_check_branch
      %10 = sbr.rel (0) target = $region5
    $region4: #{transformer_forward.19} parent=1 // pred_region
      _
    $region5: #{transformer_forward.19} parent=1 // pred_fallthru
      _
    // Predicated region
    $region6: #{transformer_forward.19} parent=1 // pred_check
      _
    $region7: #{transformer_forward.19} parent=1 // pred_check_branch
      %12 = sbr.rel (0) target = $region9
    $region8: #{transformer_forward.19} parent=1 // pred_region
      _
    $region9: #{transformer_forward.19} parent=1 // pred_fallthru
      _
    // Predicated region
    $region10: #{transformer_forward.19} parent=1 // pred_check
      _
    $region11: #{transformer_forward.19} parent=1 // pred_check_branch
      %14 = sbr.rel (0) target = $region13
    $region12: #{transformer_forward.19} parent=1 // pred_region
      _
    $region13: #{transformer_forward.19} parent=1 // pred_fallthru
      _
    %p16 = scmp.eq.s32.totalorder 0, 0
    // Predicated region
    $region14: #{transformer_forward.19} parent=1 // pred_check
      %p17 = pneg %p16
    $region15: #{transformer_forward.19} parent=1 // pred_check_branch
      %19 = sbr.rel (%p17) target = $region17
    $region16: #{transformer_forward.19} parent=1 // pred_region
      %vm20 = vcmask 130048
      %21 = vst.msk [vmem:[#allocation2] sm:$0xff] %vm20, 0.0
      %22 = vst.msk [vmem:[#allocation2 + $0x8] sm:$0xff] %vm20, 0.0
    $region17: #{transformer_forward.19} parent=1 // pred_fallthru
      _
    %v23 = vld [vmem:[#allocation2] sm:$0xff]
    %v24 = vld [vmem:[#allocation2 + $0x8] sm:$0xff]
    %v25 = vld [vmem:[%s0] sm:$0xff]
    %v26 = vld [vmem:[%s0 + $0x8] sm:$0xff]
    %v27 = vpack.c.bf16 %v26, %v25
    %v28 = vld [vmem:[%s1] sm:$0xff]
    %v29 = vld [vmem:[%s1 + $0x8] sm:$0xff]
    %v30 = vld [vmem:[%s1 + $0x10] sm:$0xff]
    %v31 = vld [vmem:[%s1 + $0x18] sm:$0xff]
    %v32 = vpack.c.bf16 %v29, %v28
    %v33 = vpack.c.bf16 %v31, %v30
    %vm34 = vcmask 261120
    %v36 = vsel %vm34, %v27, 0
    %38 = vmatprep.subr.bf16.mxu0 0
    %39 = vmatpush1.bf16.msra.mxu0 0
    %40 = vmatprep.subr.bf16.mxu0 0
    %41 = vmatpush1.bf16.msra.mxu0 0
    %42 = vmatprep.subr.bf16.mxu0 0
    %43 = vmatpush1.bf16.msra.mxu0 0
    %44 = vmatprep.subr.bf16.mxu0 0
    %45 = vmatpush1.bf16.msra.mxu0 0
    %46 = vmatprep.subr.bf16.mxu0 0
    %47 = vmatpush1.bf16.msra.mxu0 0
    %48 = vmatprep.subr.bf16.mxu0 0
    %49 = vmatpush1.bf16.msra.mxu0 0
    %50 = vmatprep.subr.bf16.mxu0 0
    %51 = vmatpush1.bf16.msra.mxu0 %v33
    %52 = vmatprep.subr.bf16.mxu0 0
    %53 = vmatpush1.bf16.msra.mxu0 %v32
    %54 = vmatprep.subr.bf16.mxu0 0
    %55 = vmatpush2.bf16.msra.mxu0 0
    %56 = vmatprep.subr.bf16.mxu0 0
    %57 = vmatpush2.bf16.msra.mxu0 0
    %58 = vmatprep.subr.bf16.mxu0 0
    %59 = vmatpush2.bf16.msra.mxu0 0
    %60 = vmatprep.subr.bf16.mxu0 0
    %61 = vmatpush2.bf16.msra.mxu0 0
    %62 = vmatprep.subr.bf16.mxu0 0
    %63 = vmatpush2.bf16.msra.mxu0 0
    %64 = vmatprep.subr.bf16.mxu0 0
    %65 = vmatpush2.bf16.msra.mxu0 0
    %66 = vmatprep.subr.bf16.mxu0 0
    %67 = vmatpush2.bf16.msra.mxu0 0
    %68 = vmatprep.subr.bf16.mxu0 0
    %69 = vmatpush2.bf16.msra.mxu0 0
    %70 = vmatprep.mubr.bf16.mxu0 0
    %71 = vmatmul.mubr.bf16.gmra.mxu0 %v36
    %v72 = vpop.f32.mrf.mxu0
    %v73 = vadd.f32 0.0, %v72
    %v74 = vpop.f32.mrf.mxu0
    %v75 = vpop.f32.mrf.mxu0
    %v76 = vadd.f32 0.0, %v75
    %v77 = vpop.f32.mrf.mxu0
    %78 = vdwg.mxu0
    %v79 = vadd.f32 %v23, %v73
    %v80 = vadd.f32 %v24, %v76
    %vm81 = vcmask 130048
    %82 = vst.msk [vmem:[#allocation2] sm:$0xff] %vm81, %v79
    %83 = vst.msk [vmem:[#allocation2 + $0x8] sm:$0xff] %vm81, %v80
    // Predicated region
    $region18: #{transformer_forward.19} parent=1 // pred_check
      %p84 = pneg %p16
    $region19: #{transformer_forward.19} parent=1 // pred_check_branch
      %86 = sbr.rel (%p84) target = $region21
    $region20: #{transformer_forward.19} parent=1 // pred_region
      %v87 = vld [vmem:[#allocation2] sm:$0xff]
      %v88 = vld [vmem:[#allocation2 + $0x8] sm:$0xff]
      %v89 = vld [vmem:[%s2] sm:$0x1]
      %v91 = vlaneseq
      %v92 = vshrl.u32 %v91, 7
      %v93 = vsub.s32 0, %v92
      %v94 = vrot.slane %v89, %v93
      %v96 = vadd.f32 %v87, %v94
      %v97 = vadd.f32 %v88, %v94
      %98 = vst.msk [vmem:[#allocation3] sm:$0xff] %vm81, %v96
      %99 = vst.msk [vmem:[#allocation3 + $0x8] sm:$0xff] %vm81, %v97
    $region21: #{transformer_forward.19} parent=1 // pred_fallthru
      _
    // Predicated region
    $region22: #{transformer_forward.19} parent=1 // pred_check
      _
    $region23: #{transformer_forward.19} parent=1 // pred_check_branch
      %101 = sbr.rel (0) target = $region25
    $region24: #{transformer_forward.19} parent=1 // pred_region
      %s103 = ssub.s32 256, 256
      %104 = vsyncadd [#allocation4], %s103
      %s105 = sshll.u32 [#allocation3], 4
      %s106 = int_to_ptr.vmem [resolvable:$true] %s105
      %111 = dma.vmem_to_hbm [thread:$0]  %s106, 256, %s3, [#allocation4], 128, 128, 8
    $region25: #{transformer_forward.19} parent=1 // pred_fallthru
      _
    // Predicated region
    $region26: #{transformer_forward.19} parent=1 // pred_check
      _
    $region27: #{transformer_forward.19} parent=1 // pred_check_branch
      %113 = sbr.rel (0) target = $region29
    $region28: #{transformer_forward.19} parent=1 // pred_region
      %114 = dma.done [#allocation4], 256
    $region29: #{transformer_forward.19} parent=1 // pred_fallthru
      _
    %115 = vsyncpa [#allocation4], 1

</llo_original>
